<compile_context>
chip_gen: v7x
topology: tpu7x:2x2x1
jax: 0.10.0
libtpu: 0.0.40
codegen_flags: <defaults>
</compile_context>

<pallas_src>
import jax
import jax.numpy as jnp
from jax.experimental import pallas as pl
from jax.experimental.pallas import tpu as pltpu

_CLS_PAD = 128          # lane-dense output width (real classes = 2)
_NEG_BIG = -1e30        # pad-lane bias so padded classes vanish under softmax


def predictor_kernel(bv_ref, h_ref, wv_ref, w1_ref, b1_ref, w2_ref, b2_ref, out_ref):
    # h block: (TB, T, H); do all math in f32 (h may be bf16 on the wire).
    h = h_ref[...].astype(jnp.float32)
    tb, t, hd = h.shape
    wv = wv_ref[...].astype(jnp.float32)                              # (1, H)

    # ---- visit attention logits, lane-dense (TB, T) ------------------------------
    # logits[b, t] = <h[b, t, :], wv> + bv   (bv is a scalar read from SMEM; it is a
    # constant over T so it cancels in the softmax, kept for fidelity)
    logits = jnp.sum(h * wv.reshape(1, 1, hd), axis=-1) + bv_ref[0]   # (TB, T)

    # softmax over T (last / lane axis); divide goes to the EUP.
    m = jnp.max(logits, axis=-1, keepdims=True)
    e = jnp.exp(logits - m)
    denom = jnp.sum(e, axis=-1, keepdims=True)
    att = e * pl.reciprocal(denom, approx=True)                       # (TB, T)

    # ---- attention-weighted sum over T on the MXU: (TB,1,T)@(TB,T,H) -> (TB,H) ---
    h_out = jnp.einsum(
        "bqt,bth->bqh", att[:, None, :], h,
        preferred_element_type=jnp.float32,
    ).reshape(tb, hd)

    # TODO(synk): nn.Dropout treated as identity (eval/inference semantics).

    # ---- w_hy MLP: Linear(H, H//2) -> ReLU -> Linear(H//2, 2 padded to 128) ------
    z1 = jnp.dot(h_out, w1_ref[...], preferred_element_type=jnp.float32) + b1_ref[...]
    z1 = jnp.maximum(z1, 0.0)
    z2 = jnp.dot(z1, w2_ref[...], preferred_element_type=jnp.float32) + b2_ref[...]  # (TB, 128)

    # ---- softmax over classes (padded lanes carry -1e30 -> exp underflows to 0) --
    m2 = jnp.max(z2, axis=-1, keepdims=True)
    e2 = jnp.exp(z2 - m2)
    d2 = jnp.sum(e2, axis=-1, keepdims=True)
    out_ref[...] = (e2 * pl.reciprocal(d2, approx=True)).astype(out_ref.dtype)


def _round_up(x, m):
    return ((x + m - 1) // m) * m


def _choose_batch_tile(B, T, H):
    """Largest 8-aligned batch tile whose double-buffered f32 h block fits a
    conservative VMEM budget (safe on v5e's 16 MiB scoped default and v7x's 64 MiB
    physical VMEM), while preferring >= 2 grid steps so the h DMA pipelines and
    (on v7x) the parallel batch axis can shard across both TensorCores."""
    budget = 8 * 1024 * 1024                        # bytes for the 2x-buffered h block
    rows = budget // max(1, 2 * T * H * 4)
    rows = max(8, min(512, rows))
    rows = min(rows, _round_up(pl.cdiv(B, 2), 8))   # aim for >= 2 grid steps
    return max(8, (rows // 8) * 8)


def predictor_forward(h, params):
    B, T, H = h.shape
    Hh = params["w1"].shape[0]          # H // 2
    n_cls = params["w2"].shape[0]       # 2

    TB = _choose_batch_tile(B, T, H)
    Bp = _round_up(B, TB)
    grid = (Bp // TB,)

    hp = h if Bp == B else jnp.pad(h, ((0, Bp - B), (0, 0), (0, 0)))

    # Weights pre-transposed to (in, out); the final layer is padded to 128 lanes.
    wv = params["wv"].astype(jnp.float32)                              # (1, H)
    bv = params["bv"].reshape(1).astype(jnp.float32)                   # (1,) -> SMEM
    w1_t = params["w1"].T.astype(jnp.float32)                          # (H, Hh)
    b1 = params["b1"].reshape(1, Hh).astype(jnp.float32)               # (1, Hh)
    w2p = jnp.zeros((Hh, _CLS_PAD), jnp.float32).at[:, :n_cls].set(
        params["w2"].T.astype(jnp.float32))                            # (Hh, 128)
    b2p = jnp.full((1, _CLS_PAD), _NEG_BIG, jnp.float32).at[:, :n_cls].set(
        params["b2"].reshape(1, n_cls).astype(jnp.float32))            # (1, 128)

    flops = 2 * B * T * H                      # attention logits
    flops += 2 * B * T * H                     # attention-weighted sum (MXU)
    flops += 2 * B * H * Hh + 2 * B * Hh * n_cls
    cost = pl.CostEstimate(
        flops=int(flops),
        transcendentals=int(B * (T + n_cls)),
        bytes_accessed=int(Bp * T * H * hp.dtype.itemsize
                           + 4 * (H + H * Hh + Hh + Hh * _CLS_PAD + _CLS_PAD)
                           + 4 * Bp * _CLS_PAD),
    )

    grid_spec = pltpu.PrefetchScalarGridSpec(
        num_scalar_prefetch=0,
        grid=grid,
        in_specs=[
            pl.BlockSpec(memory_space=pltpu.MemorySpace.SMEM),         # bv (scalar)
            pl.BlockSpec((TB, T, H), lambda i: (i, 0, 0)),             # h  (batch-tiled)
            pl.BlockSpec((1, H), lambda i: (0, 0)),                    # wv (resident)
            pl.BlockSpec((H, Hh), lambda i: (0, 0)),                   # w1
            pl.BlockSpec((1, Hh), lambda i: (0, 0)),                   # b1
            pl.BlockSpec((Hh, _CLS_PAD), lambda i: (0, 0)),            # w2 (lane-padded)
            pl.BlockSpec((1, _CLS_PAD), lambda i: (0, 0)),             # b2 (lane-padded)
        ],
        out_specs=pl.BlockSpec((TB, _CLS_PAD), lambda i: (i, 0)),
    )

    out_padded = pl.pallas_call(
        predictor_kernel,
        out_shape=jax.ShapeDtypeStruct((Bp, _CLS_PAD), jnp.float32),
        grid_spec=grid_spec,
        compiler_params=pltpu.CompilerParams(
            dimension_semantics=("parallel",),   # v7x: shard batch tiles over both TCs
            vmem_limit_bytes=32 * 1024 * 1024,
        ),
        cost_estimate=cost,
    )(bv, hp, wv, w1_t, b1, w2p, b2p)

    return out_padded[:B, :n_cls]


def init_params(key, h_dim):
    """Deterministic synthetic init mirroring the PyTorch module's parameter shapes."""
    k1, k2, k3, k4, k5, k6 = jax.random.split(key, 6)
    bound_v = 1.0 / jnp.sqrt(jnp.float32(h_dim))
    bound_2 = 1.0 / jnp.sqrt(jnp.float32(h_dim // 2))
    return {
        # self.visit = nn.Linear(h_dim, 1): weight (1, h_dim), bias (1,)
        "wv": jax.random.uniform(k1, (1, h_dim), jnp.float32, -bound_v, bound_v),
        "bv": jax.random.uniform(k2, (1,), jnp.float32, -bound_v, bound_v),
        # self.w_hy[0] = nn.Linear(h_dim, h_dim//2), kaiming_normal fan_in
        "w1": jax.random.normal(k3, (h_dim // 2, h_dim), jnp.float32) * jnp.sqrt(2.0 / h_dim),
        "b1": jax.random.uniform(k4, (h_dim // 2,), jnp.float32, -bound_v, bound_v),
        # self.w_hy[2] = nn.Linear(h_dim//2, 2)
        "w2": jax.random.uniform(k5, (2, h_dim // 2), jnp.float32, -bound_2, bound_2),
        "b2": jax.random.uniform(k6, (2,), jnp.float32, -bound_2, bound_2),
    }


def predictor_ref(h, params):
    """Pure-JAX reference of the PyTorch forward (dropout in eval mode)."""
    logits = h.astype(jnp.float32) @ params["wv"].T + params["bv"]   # (B, T, 1)
    att = jax.nn.softmax(logits, axis=1)                             # softmax over T
    h_out = jnp.sum(att * h.astype(jnp.float32), axis=1)             # (B, H)
    z1 = jax.nn.relu(h_out @ params["w1"].T + params["b1"])
    z2 = z1 @ params["w2"].T + params["b2"]
    return jax.nn.softmax(z2, axis=-1)                               # (B, 2)


if __name__ == "__main__":
    B, T, H = 16, 8, 32          # B=16 -> 2 batch tiles of 8 -> pipelined / shardable grid
    key = jax.random.PRNGKey(0)
    k_h, k_p = jax.random.split(key)

    h = jax.random.normal(k_h, (B, T, H), dtype=jnp.float32)
    params = init_params(k_p, H)

    out = jax.block_until_ready(predictor_forward(h, params))
    ref = predictor_ref(h, params)

    assert out.shape == (B, 2), out.shape
    assert bool(jnp.all(jnp.isfinite(out)))
    # Tolerance is looser than f32 epsilon because both softmax normalizations use the
    # EUP approx reciprocal (pl.reciprocal(..., approx=True)).
    assert jnp.allclose(out, ref, atol=2e-2, rtol=2e-2), (out, ref)
    assert jnp.allclose(jnp.sum(out, axis=-1), 1.0, atol=1e-2)

    # bf16 activations: halves HBM traffic for the (B,T,H) load; kernel math stays f32.
    out_bf16 = jax.block_until_ready(predictor_forward(h.astype(jnp.bfloat16), params))
    assert out_bf16.shape == (B, 2)
    assert jnp.allclose(out_bf16, ref, atol=5e-2, rtol=5e-2)

    print("KERNEL_OK")
</pallas_src>

<mosaic_0001>
module attributes {stable_mosaic.version = 11 : i64} {
  func.func @predictor_kernel(%arg0: i32, %arg1: memref<1xf32, #tpu.memory_space<smem>>, %arg2: memref<8x8x32xf32, #tpu.memory_space<vmem>>, %arg3: memref<1x32xf32, #tpu.memory_space<vmem>>, %arg4: memref<32x16xf32, #tpu.memory_space<vmem>>, %arg5: memref<1x16xf32, #tpu.memory_space<vmem>>, %arg6: memref<16x128xf32, #tpu.memory_space<vmem>>, %arg7: memref<1x128xf32, #tpu.memory_space<vmem>>, %arg8: memref<8x128xf32, #tpu.memory_space<vmem>>) attributes {dimension_semantics = [#tpu.dimension_semantics<parallel>], iteration_bounds = array<i64: 2>, scalar_prefetch = 0 : i64, scratch_operands = 0 : i64, tpu.core_type = #tpu.core_type<tc>, window_params = [{transform_indices = @transform_0, window_bounds = array<i64: 1>}, {transform_indices = @transform_1, window_bounds = array<i64: 8, 8, 32>}, {pipeline_mode = #tpu.pipeline_mode<synchronous>, transform_indices = @transform_2, window_bounds = array<i64: 1, 32>}, {pipeline_mode = #tpu.pipeline_mode<synchronous>, transform_indices = @transform_3, window_bounds = array<i64: 32, 16>}, {pipeline_mode = #tpu.pipeline_mode<synchronous>, transform_indices = @transform_4, window_bounds = array<i64: 1, 16>}, {pipeline_mode = #tpu.pipeline_mode<synchronous>, transform_indices = @transform_5, window_bounds = array<i64: 16, 128>}, {pipeline_mode = #tpu.pipeline_mode<synchronous>, transform_indices = @transform_6, window_bounds = array<i64: 1, 128>}, {transform_indices = @transform_7, window_bounds = array<i64: 8, 128>}]} {
    %c0 = arith.constant 0 : index
    %c0_0 = arith.constant 0 : index
    %c0_1 = arith.constant 0 : index
    %0 = vector.load %arg2[%c0, %c0_0, %c0_1] : memref<8x8x32xf32, #tpu.memory_space<vmem>>, vector<8x8x32xf32>
    %c0_2 = arith.constant 0 : index
    %c0_3 = arith.constant 0 : index
    %1 = vector.load %arg3[%c0_2, %c0_3] : memref<1x32xf32, #tpu.memory_space<vmem>>, vector<1x32xf32>
    %2 = vector.shape_cast %1 : vector<1x32xf32> to vector<1x1x32xf32>
    %3 = vector.broadcast %2 : vector<1x1x32xf32> to vector<8x8x32xf32>
    %4 = arith.mulf %0, %3 : vector<8x8x32xf32>
    %cst = arith.constant dense<0.000000e+00> : vector<8x8xf32>
    %5 = vector.multi_reduction <add>, %4, %cst [2] : vector<8x8x32xf32> to vector<8x8xf32>
    %c0_4 = arith.constant 0 : index
    %6 = memref.load %arg1[%c0_4] : memref<1xf32, #tpu.memory_space<smem>>
    %7 = vector.broadcast %6 : f32 to vector<8x8xf32>
    %8 = arith.addf %5, %7 : vector<8x8xf32>
    %cst_5 = arith.constant dense<0xFF800000> : vector<8xf32>
    %9 = vector.multi_reduction <maximumf>, %8, %cst_5 [1] : vector<8x8xf32> to vector<8xf32>
    %10 = vector.shape_cast %9 : vector<8xf32> to vector<8x1xf32>
    %11 = vector.broadcast %10 : vector<8x1xf32> to vector<8x8xf32>
    %12 = arith.subf %8, %11 : vector<8x8xf32>
    %13 = math.exp %12 : vector<8x8xf32>
    %cst_6 = arith.constant dense<0.000000e+00> : vector<8xf32>
    %14 = vector.multi_reduction <add>, %13, %cst_6 [1] : vector<8x8xf32> to vector<8xf32>
    %15 = vector.shape_cast %14 : vector<8xf32> to vector<8x1xf32>
    %16 = tpu.reciprocal %15 {approx = true} : vector<8x1xf32> -> vector<8x1xf32>
    %17 = vector.broadcast %16 : vector<8x1xf32> to vector<8x8xf32>
    %18 = arith.mulf %13, %17 : vector<8x8xf32>
    %19 = vector.shape_cast %18 : vector<8x8xf32> to vector<8x1x8xf32>
    "tpu.trace_start"() <{level = 10 : i32, message = "bqt,bth->bqh"}> : () -> ()
    %cst_7 = arith.constant dense<0.000000e+00> : vector<8x1x32xf32>
    %20 = tpu.matmul %19, %0, %cst_7 {dimension_numbers = #tpu.dot_dimension_numbers<[2], [1], [1], [2], [0, 0, 0, 1, 1, 2], [0], [0]>} : vector<8x1x8xf32>, vector<8x8x32xf32>, vector<8x1x32xf32> -> vector<8x1x32xf32>
    "tpu.trace_stop"() : () -> ()
    %21 = vector.shape_cast %20 : vector<8x1x32xf32> to vector<8x32xf32>
    %c0_8 = arith.constant 0 : index
    %c0_9 = arith.constant 0 : index
    %22 = vector.load %arg4[%c0_8, %c0_9] : memref<32x16xf32, #tpu.memory_space<vmem>>, vector<32x16xf32>
    %cst_10 = arith.constant dense<0.000000e+00> : vector<8x16xf32>
    %23 = tpu.matmul %21, %22, %cst_10 {dimension_numbers = #tpu.dot_dimension_numbers<[1], [0], [0], [1], [0, 0, 1, 1], [], []>} : vector<8x32xf32>, vector<32x16xf32>, vector<8x16xf32> -> vector<8x16xf32>
    %c0_11 = arith.constant 0 : index
    %c0_12 = arith.constant 0 : index
    %24 = vector.load %arg5[%c0_11, %c0_12] : memref<1x16xf32, #tpu.memory_space<vmem>>, vector<1x16xf32>
    %25 = vector.broadcast %24 : vector<1x16xf32> to vector<8x16xf32>
    %26 = arith.addf %23, %25 : vector<8x16xf32>
    %cst_13 = arith.constant 0.000000e+00 : f32
    %27 = vector.broadcast %cst_13 : f32 to vector<8x16xf32>
    %28 = arith.maximumf %26, %27 : vector<8x16xf32>
    %c0_14 = arith.constant 0 : index
    %c0_15 = arith.constant 0 : index
    %29 = vector.load %arg6[%c0_14, %c0_15] : memref<16x128xf32, #tpu.memory_space<vmem>>, vector<16x128xf32>
    %cst_16 = arith.constant dense<0.000000e+00> : vector<8x128xf32>
    %30 = tpu.matmul %28, %29, %cst_16 {dimension_numbers = #tpu.dot_dimension_numbers<[1], [0], [0], [1], [0, 0, 1, 1], [], []>} : vector<8x16xf32>, vector<16x128xf32>, vector<8x128xf32> -> vector<8x128xf32>
    %c0_17 = arith.constant 0 : index
    %c0_18 = arith.constant 0 : index
    %31 = vector.load %arg7[%c0_17, %c0_18] : memref<1x128xf32, #tpu.memory_space<vmem>>, vector<1x128xf32>
    %32 = vector.broadcast %31 : vector<1x128xf32> to vector<8x128xf32>
    %33 = arith.addf %30, %32 : vector<8x128xf32>
    %cst_19 = arith.constant dense<0xFF800000> : vector<8xf32>
    %34 = vector.multi_reduction <maximumf>, %33, %cst_19 [1] : vector<8x128xf32> to vector<8xf32>
    %35 = vector.shape_cast %34 : vector<8xf32> to vector<8x1xf32>
    %36 = vector.broadcast %35 : vector<8x1xf32> to vector<8x128xf32>
    %37 = arith.subf %33, %36 : vector<8x128xf32>
    %38 = math.exp %37 : vector<8x128xf32>
    %cst_20 = arith.constant dense<0.000000e+00> : vector<8xf32>
    %39 = vector.multi_reduction <add>, %38, %cst_20 [1] : vector<8x128xf32> to vector<8xf32>
    %40 = vector.shape_cast %39 : vector<8xf32> to vector<8x1xf32>
    %41 = tpu.reciprocal %40 {approx = true} : vector<8x1xf32> -> vector<8x1xf32>
    %42 = vector.broadcast %41 : vector<8x1xf32> to vector<8x128xf32>
    %43 = arith.mulf %38, %42 : vector<8x128xf32>
    %c0_21 = arith.constant 0 : index
    %c0_22 = arith.constant 0 : index
    %44 = vector.load %arg8[%c0_21, %c0_22] : memref<8x128xf32, #tpu.memory_space<vmem>>, vector<8x128xf32>
    tpu.vector_store %arg8[%c0_21, %c0_22], %43 {strides = array<i32>} : memref<8x128xf32, #tpu.memory_space<vmem>>, vector<8x128xf32>,
    return
  }
  func.func @transform_0(%arg0: i32) -> i32 {
    %c0_i32 = arith.constant 0 : i32
    %c0_i32_0 = arith.constant 0 : i32
    return %c0_i32 : i32
  }
  func.func @transform_1(%arg0: i32) -> (i32, i32, i32) {
    %c0_i32 = arith.constant 0 : i32
    %c0_i32_0 = arith.constant 0 : i32
    %c0_i32_1 = arith.constant 0 : i32
    return %arg0, %c0_i32, %c0_i32_0 : i32, i32, i32
  }
  func.func @transform_2(%arg0: i32) -> (i32, i32) {
    %c0_i32 = arith.constant 0 : i32
    %c0_i32_0 = arith.constant 0 : i32
    %c0_i32_1 = arith.constant 0 : i32
    return %c0_i32, %c0_i32_0 : i32, i32
  }
  func.func @transform_3(%arg0: i32) -> (i32, i32) {
    %c0_i32 = arith.constant 0 : i32
    %c0_i32_0 = arith.constant 0 : i32
    %c0_i32_1 = arith.constant 0 : i32
    return %c0_i32, %c0_i32_0 : i32, i32
  }
  func.func @transform_4(%arg0: i32) -> (i32, i32) {
    %c0_i32 = arith.constant 0 : i32
    %c0_i32_0 = arith.constant 0 : i32
    %c0_i32_1 = arith.constant 0 : i32
    return %c0_i32, %c0_i32_0 : i32, i32
  }
  func.func @transform_5(%arg0: i32) -> (i32, i32) {
    %c0_i32 = arith.constant 0 : i32
    %c0_i32_0 = arith.constant 0 : i32
    %c0_i32_1 = arith.constant 0 : i32
    return %c0_i32, %c0_i32_0 : i32, i32
  }
  func.func @transform_6(%arg0: i32) -> (i32, i32) {
    %c0_i32 = arith.constant 0 : i32
    %c0_i32_0 = arith.constant 0 : i32
    %c0_i32_1 = arith.constant 0 : i32
    return %c0_i32, %c0_i32_0 : i32, i32
  }
  func.func @transform_7(%arg0: i32) -> (i32, i32) {
    %c0_i32 = arith.constant 0 : i32
    %c0_i32_0 = arith.constant 0 : i32
    return %arg0, %c0_i32 : i32, i32
  }
}

</mosaic_0001>

<llo_original>
// kernel: tpu_custom_call.1
$region0: #{tpu_custom_call.1}
  #allocation0 [shape = 'u32[]', space=smem, size = 0x4, offset = 0x4, fixed_abs, tag = 'smem constant byte address 0x4 - core index']
  #allocation1 [shape = 'u32[144,128]{1,0:T(1,128)}', space=vmem, size = 0x12000, scoped, tag = 'internal scratch']
  #allocation2 [shape = 'f32[1]{0:T(128)S(6)}', space=smem, size = 0x200, scoped, tag = 'scoped memory for tpu_custom_call.1']
  %s0 = inlined_call_operand.<no memory space> [shape: f32[1], index: 0, kind: input, shape index: {}]
  %s1 = inlined_call_operand.hbm [shape: f32[16,8,32], index: 1, kind: input, shape index: {}]
  %s2 = inlined_call_operand.vmem [shape: f32[1,32], index: 2, kind: input, shape index: {}]
  %s3 = inlined_call_operand.vmem [shape: f32[32,16], index: 3, kind: input, shape index: {}]
  %s4 = inlined_call_operand.vmem [shape: f32[1,16], index: 4, kind: input, shape index: {}]
  %s5 = inlined_call_operand.vmem [shape: f32[16,128], index: 5, kind: input, shape index: {}]
  %s6 = inlined_call_operand.vmem [shape: f32[1,128], index: 6, kind: input, shape index: {}]
  %s7 = inlined_call_operand.hbm [shape: f32[16,128], index: 7, kind: output, shape index: {}]
  %s8 = sld [smem:[#allocation0]]
  $region65: #{tpu_custom_call.1} parent=0
    _
  %s10 = ssub.s32 1, %s8
  %s11 = scalar_select 0, %s10, %s8
  %12 = sst [smem:[#allocation2]] %s0
  $region1: #{tpu_custom_call.1} parent=0
    #allocation3 [shape = 'u8[65536]{0}', space=vmem, size = 0x10000, scoped, tag = 'input window, operand 1']
    #allocation4 [shape = 's32[2]{0}', space=sflag, size = 0x8, scoped, tag = 'scoped memory for tpu_custom_call.1']
    #allocation5 [shape = 's32[2]{0}', space=sflag, size = 0x8, scoped, tag = 'scoped memory for tpu_custom_call.1']
    #allocation6 [shape = 'u8[8192]{0}', space=vmem, size = 0x2000, scoped, tag = 'output window, operand 0']
    %13 = vsyncpa [#allocation4], 0
    %s14 = scalar_lea.sflag [#allocation4], 1
    %15 = vsyncpa %s14, 0
    %16 = vsyncpa [#allocation5], 0
    %s17 = scalar_lea.sflag [#allocation5], 1
    %18 = vsyncpa %s17, 0
    loop: start=0, step=1, limit=4
    $region2: #{tpu_custom_call.1} parent=1 // loop_pre_header
      _
    $region3: #{tpu_custom_call.1} parent=1 // loop_header
      %s20 = sphi 0, %s24
      %p21 = scmp.ge.s32.totalorder %s20, 4
      %s28 = sphi 0, %s28
      %s30 = sphi 0, %s28
      %s31 = sphi 0, %s30
      %s45 = sphi 0, %s31
      %s51 = sphi 0, %s53
      %s54 = sphi 0, %s51
      %s55 = sphi 0, %s54
      %s71 = sphi 0, %s55
      %s75 = sphi 0, %s75
      %s77 = sphi 0, %s75
      %s78 = sphi 0, %s77
      %s92 = sphi 0, %s78
      %s96 = sphi 0, %s96
      %s98 = sphi 0, %s96
      %s99 = sphi 0, %s98
      %s113 = sphi 0, %s99
      %s117 = sphi 0, %s117
      %s119 = sphi 0, %s117
      %s120 = sphi 0, %s119
      %s134 = sphi 0, %s120
      %s138 = sphi 0, %s138
      %s140 = sphi 0, %s138
      %s141 = sphi 0, %s140
      %s155 = sphi 0, %s141
      %s159 = sphi 0, %s159
      %s161 = sphi 0, %s159
      %s162 = sphi 0, %s161
      %s176 = sphi 0, %s162
      %s182 = sphi 0, %s184
      %s185 = sphi 0, %s182
      %s186 = sphi 0, %s185
      %s202 = sphi 0, %s186
    $region4: #{tpu_custom_call.1} parent=1 // loop_header_branch
      %23 = sbr.rel (%p21) target = $region8
    $region5: #{tpu_custom_call.1} parent=1 // loop_body
      %s25 = ssub.s32 %s20, 1
      %s26 = ssub.s32 %s20, 2
      %s27 = sadd.s32 %s20, 1
      %s29 = sadd.s32 %s28, 1
      %p32 = scmp.eq.s32.totalorder %s20, 1
      %p33 = scmp.ne.s32.totalorder %s28, %s30
      %p34 = scmp.eq.s32.totalorder %s20, 0
      %p35 = por %p33, %p34
      %p36 = scmp.ne.s32.totalorder %s28, %s30
      %p37 = scmp.eq.s32.totalorder %s25, 1
      %p38 = por %p36, %p37
      %p39 = scmp.ne.s32.totalorder %s30, %s31
      %p40 = scmp.eq.s32.totalorder %s25, 0
      %p41 = por %p39, %p40
      %p42 = scmp.ne.s32.totalorder %s30, %s31
      %p43 = scmp.eq.s32.totalorder %s26, 1
      %p44 = por %p42, %p43
      %p46 = scmp.ne.s32.totalorder %s31, %s45
      %p47 = scmp.eq.s32.totalorder %s26, 0
      %p48 = por %p46, %p47
      %s49 = ssub.s32 %s20, %s27
      %p50 = scmp.eq.s32.totalorder %s49, 0
      %s52 = sadd.s32 %s51, 1
      %s53 = scalar_select %p50, %s51, %s52
      %p56 = pneg %p50
      %p57 = scmp.eq.s32.totalorder %s20, 1
      %p58 = por %p56, %p57
      %p59 = scmp.ne.s32.totalorder %s51, %s54
      %p60 = scmp.eq.s32.totalorder %s20, 0
      %p61 = por %p59, %p60
      %p62 = scmp.ne.s32.totalorder %s51, %s54
      %p63 = scmp.eq.s32.totalorder %s25, 1
      %p64 = por %p62, %p63
      %p65 = scmp.ne.s32.totalorder %s54, %s55
      %p66 = scmp.eq.s32.totalorder %s25, 0
      %p67 = por %p65, %p66
      %p68 = scmp.ne.s32.totalorder %s54, %s55
      %p69 = scmp.eq.s32.totalorder %s26, 1
      %p70 = por %p68, %p69
      %p72 = scmp.ne.s32.totalorder %s55, %s71
      %p73 = scmp.eq.s32.totalorder %s26, 0
      %p74 = por %p72, %p73
      %s76 = sadd.s32 %s75, 1
      %p79 = scmp.eq.s32.totalorder %s20, 1
      %p80 = scmp.ne.s32.totalorder %s75, %s77
      %p81 = scmp.eq.s32.totalorder %s20, 0
      %p82 = por %p80, %p81
      %p83 = scmp.ne.s32.totalorder %s75, %s77
      %p84 = scmp.eq.s32.totalorder %s25, 1
      %p85 = por %p83, %p84
      %p86 = scmp.ne.s32.totalorder %s77, %s78
      %p87 = scmp.eq.s32.totalorder %s25, 0
      %p88 = por %p86, %p87
      %p89 = scmp.ne.s32.totalorder %s77, %s78
      %p90 = scmp.eq.s32.totalorder %s26, 1
      %p91 = por %p89, %p90
      %p93 = scmp.ne.s32.totalorder %s78, %s92
      %p94 = scmp.eq.s32.totalorder %s26, 0
      %p95 = por %p93, %p94
      %s97 = sadd.s32 %s96, 1
      %p100 = scmp.eq.s32.totalorder %s20, 1
      %p101 = scmp.ne.s32.totalorder %s96, %s98
      %p102 = scmp.eq.s32.totalorder %s20, 0
      %p103 = por %p101, %p102
      %p104 = scmp.ne.s32.totalorder %s96, %s98
      %p105 = scmp.eq.s32.totalorder %s25, 1
      %p106 = por %p104, %p105
      %p107 = scmp.ne.s32.totalorder %s98, %s99
      %p108 = scmp.eq.s32.totalorder %s25, 0
      %p109 = por %p107, %p108
      %p110 = scmp.ne.s32.totalorder %s98, %s99
      %p111 = scmp.eq.s32.totalorder %s26, 1
      %p112 = por %p110, %p111
      %p114 = scmp.ne.s32.totalorder %s99, %s113
      %p115 = scmp.eq.s32.totalorder %s26, 0
      %p116 = por %p114, %p115
      %s118 = sadd.s32 %s117, 1
      %p121 = scmp.eq.s32.totalorder %s20, 1
      %p122 = scmp.ne.s32.totalorder %s117, %s119
      %p123 = scmp.eq.s32.totalorder %s20, 0
      %p124 = por %p122, %p123
      %p125 = scmp.ne.s32.totalorder %s117, %s119
      %p126 = scmp.eq.s32.totalorder %s25, 1
      %p127 = por %p125, %p126
      %p128 = scmp.ne.s32.totalorder %s119, %s120
      %p129 = scmp.eq.s32.totalorder %s25, 0
      %p130 = por %p128, %p129
      %p131 = scmp.ne.s32.totalorder %s119, %s120
      %p132 = scmp.eq.s32.totalorder %s26, 1
      %p133 = por %p131, %p132
      %p135 = scmp.ne.s32.totalorder %s120, %s134
      %p136 = scmp.eq.s32.totalorder %s26, 0
      %p137 = por %p135, %p136
      %s139 = sadd.s32 %s138, 1
      %p142 = scmp.eq.s32.totalorder %s20, 1
      %p143 = scmp.ne.s32.totalorder %s138, %s140
      %p144 = scmp.eq.s32.totalorder %s20, 0
      %p145 = por %p143, %p144
      %p146 = scmp.ne.s32.totalorder %s138, %s140
      %p147 = scmp.eq.s32.totalorder %s25, 1
      %p148 = por %p146, %p147
      %p149 = scmp.ne.s32.totalorder %s140, %s141
      %p150 = scmp.eq.s32.totalorder %s25, 0
      %p151 = por %p149, %p150
      %p152 = scmp.ne.s32.totalorder %s140, %s141
      %p153 = scmp.eq.s32.totalorder %s26, 1
      %p154 = por %p152, %p153
      %p156 = scmp.ne.s32.totalorder %s141, %s155
      %p157 = scmp.eq.s32.totalorder %s26, 0
      %p158 = por %p156, %p157
      %s160 = sadd.s32 %s159, 1
      %p163 = scmp.eq.s32.totalorder %s20, 1
      %p164 = scmp.ne.s32.totalorder %s159, %s161
      %p165 = scmp.eq.s32.totalorder %s20, 0
      %p166 = por %p164, %p165
      %p167 = scmp.ne.s32.totalorder %s159, %s161
      %p168 = scmp.eq.s32.totalorder %s25, 1
      %p169 = por %p167, %p168
      %p170 = scmp.ne.s32.totalorder %s161, %s162
      %p171 = scmp.eq.s32.totalorder %s25, 0
      %p172 = por %p170, %p171
      %p173 = scmp.ne.s32.totalorder %s161, %s162
      %p174 = scmp.eq.s32.totalorder %s26, 1
      %p175 = por %p173, %p174
      %p177 = scmp.ne.s32.totalorder %s162, %s176
      %p178 = scmp.eq.s32.totalorder %s26, 0
      %p179 = por %p177, %p178
      %s180 = ssub.s32 %s20, %s27
      %p181 = scmp.eq.s32.totalorder %s180, 0
      %s183 = sadd.s32 %s182, 1
      %s184 = scalar_select %p181, %s182, %s183
      %p187 = pneg %p181
      %p188 = scmp.eq.s32.totalorder %s20, 1
      %p189 = por %p187, %p188
      %p190 = scmp.ne.s32.totalorder %s182, %s185
      %p191 = scmp.eq.s32.totalorder %s20, 0
      %p192 = por %p190, %p191
      %p193 = scmp.ne.s32.totalorder %s182, %s185
      %p194 = scmp.eq.s32.totalorder %s25, 1
      %p195 = por %p193, %p194
      %p196 = scmp.ne.s32.totalorder %s185, %s186
      %p197 = scmp.eq.s32.totalorder %s25, 0
      %p198 = por %p196, %p197
      %p199 = scmp.ne.s32.totalorder %s185, %s186
      %p200 = scmp.eq.s32.totalorder %s26, 1
      %p201 = por %p199, %p200
      %p203 = scmp.ne.s32.totalorder %s186, %s202
      %p204 = scmp.eq.s32.totalorder %s26, 0
      %p205 = por %p203, %p204
      %p206 = scmp.le.s32.totalorder 1, %s20
      %p207 = scmp.lt.s32.totalorder %s20, 3
      %p208 = pnand %p206, %p207
      %p209 = pneg %p208
      // Predicated region
      $region9: #{tpu_custom_call.1} parent=5 // pred_check
        _
      $region10: #{tpu_custom_call.1} parent=5 // pred_check_branch
        %211 = sbr.rel (%p208) target = $region12
      $region11: #{tpu_custom_call.1} parent=5 // pred_region
        %s212 = ssub.s32 %s20, 1
        // Predicated region
        $region13: #{tpu_custom_call.1} parent=11 // pred_check
          %p213 = pneg %p41
        $region14: #{tpu_custom_call.1} parent=11 // pred_check_branch
          %215 = sbr.rel (%p213) target = $region16
        $region15: #{tpu_custom_call.1} parent=11 // pred_region
          _
        $region16: #{tpu_custom_call.1} parent=11 // pred_fallthru
          _
        // Predicated region
        $region17: #{tpu_custom_call.1} parent=11 // pred_check
          %p216 = pneg %p88
        $region18: #{tpu_custom_call.1} parent=11 // pred_check_branch
          %218 = sbr.rel (%p216) target = $region20
        $region19: #{tpu_custom_call.1} parent=11 // pred_region
          _
        $region20: #{tpu_custom_call.1} parent=11 // pred_fallthru
          _
        // Predicated region
        $region21: #{tpu_custom_call.1} parent=11 // pred_check
          %p219 = pneg %p109
        $region22: #{tpu_custom_call.1} parent=11 // pred_check_branch
          %221 = sbr.rel (%p219) target = $region24
        $region23: #{tpu_custom_call.1} parent=11 // pred_region
          _
        $region24: #{tpu_custom_call.1} parent=11 // pred_fallthru
          _
        // Predicated region
        $region25: #{tpu_custom_call.1} parent=11 // pred_check
          %p222 = pneg %p130
        $region26: #{tpu_custom_call.1} parent=11 // pred_check_branch
          %224 = sbr.rel (%p222) target = $region28
        $region27: #{tpu_custom_call.1} parent=11 // pred_region
          _
        $region28: #{tpu_custom_call.1} parent=11 // pred_fallthru
          _
        // Predicated region
        $region29: #{tpu_custom_call.1} parent=11 // pred_check
          %p225 = pneg %p151
        $region30: #{tpu_custom_call.1} parent=11 // pred_check_branch
          %227 = sbr.rel (%p225) target = $region32
        $region31: #{tpu_custom_call.1} parent=11 // pred_region
          _
        $region32: #{tpu_custom_call.1} parent=11 // pred_fallthru
          _
        // Predicated region
        $region33: #{tpu_custom_call.1} parent=11 // pred_check
          %p228 = pneg %p172
        $region34: #{tpu_custom_call.1} parent=11 // pred_check_branch
          %230 = sbr.rel (%p228) target = $region36
        $region35: #{tpu_custom_call.1} parent=11 // pred_region
          _
        $region36: #{tpu_custom_call.1} parent=11 // pred_fallthru
          _
      $region12: #{tpu_custom_call.1} parent=5 // pred_fallthru
        _
      %p231 = scmp.lt.s32.totalorder %s20, 2
      // Predicated region
      $region37: #{tpu_custom_call.1} parent=5 // pred_check
        %p232 = pneg %p231
      $region38: #{tpu_custom_call.1} parent=5 // pred_check_branch
        %234 = sbr.rel (%p232) target = $region40
      $region39: #{tpu_custom_call.1} parent=5 // pred_region
        // Predicated region
        $region41: #{tpu_custom_call.1} parent=39 // pred_check
          %p235 = pneg %p61
        $region42: #{tpu_custom_call.1} parent=39 // pred_check_branch
          %237 = sbr.rel (%p235) target = $region44
        $region43: #{tpu_custom_call.1} parent=39 // pred_region
          %s238 = sand.u32 %s51, 1
          %s239 = scalar_lea.sflag [#allocation4], %s238
          %s240 = sand.u32 %s51, 1
          %s241 = smul.addr %s240, 64
          %s242 = scalar_lea.vmem [#allocation3], %s241
          %s243 = smul.u32 8, %s20
          %s245 = ssub.s32 1024, 1024
          %246 = vsyncadd %s239, %s245
          %s247 = smul.addr %s243, 128
          %s248 = scalar_lea.hbm %s1, %s247
          %s249 = sshll.u32 %s242, 4
          %s250 = int_to_ptr.vmem [resolvable:$true] %s249
          %255 = dma.hbm_to_vmem [thread:$0]  %s248, 1024, %s250, %s239, 128, 128, 8
        $region44: #{tpu_custom_call.1} parent=39 // pred_fallthru
          _
      $region40: #{tpu_custom_call.1} parent=5 // pred_fallthru
        _
      %p256 = scmp.le.s32.totalorder 1, %s20
      %p257 = scmp.lt.s32.totalorder %s20, 3
      %p258 = pnand %p256, %p257
      %p259 = pneg %p258
      // Predicated region
      $region45: #{tpu_custom_call.1} parent=5 // pred_check
        _
      $region46: #{tpu_custom_call.1} parent=5 // pred_check_branch
        %261 = sbr.rel (%p258) target = $region48
      $region47: #{tpu_custom_call.1} parent=5 // pred_region
        %s262 = ssub.s32 %s20, 1
        %s263 = sand.u32 %s54, 1
        %s264 = scalar_lea.sflag [#allocation4], %s263
        %s265 = sand.u32 %s54, 1
        %s266 = smul.addr %s265, 64
        %s267 = scalar_lea.vmem [#allocation3], %s266
        // Predicated region
        $region49: #{tpu_custom_call.1} parent=47 // pred_check
          %p268 = pneg %p67
        $region50: #{tpu_custom_call.1} parent=47 // pred_check_branch
          %270 = sbr.rel (%p268) target = $region52
        $region51: #{tpu_custom_call.1} parent=47 // pred_region
          %271 = dma.done %s264, 1024
        $region52: #{tpu_custom_call.1} parent=47 // pred_fallthru
          _
        %p272 = pneg %p41
        %p273 = pneg %p38
        %s274 = sand.u32 %s54, 1
        %s275 = scalar_lea.sflag [#allocation4], %s274
        %s276 = sand.u32 %s54, 1
        %s277 = smul.addr %s276, 64
        %s278 = scalar_lea.vmem [#allocation3], %s277
        %p279 = pneg %p67
        %p280 = pneg %p64
        %p281 = pneg %p88
        %p282 = pneg %p85
        %p283 = pneg %p109
        %p284 = pneg %p106
        %p285 = pneg %p130
        %p286 = pneg %p127
        %p287 = pneg %p151
        %p288 = pneg %p148
        %p289 = pneg %p172
        %p290 = pneg %p169
        %p291 = pneg %p198
        %p292 = pneg %p195
        %s293 = sand.u32 %s185, 1
        %s294 = scalar_lea.sflag [#allocation5], %s293
        %s295 = sand.u32 %s185, 1
        %s296 = smul.addr %s295, 8
        %s297 = scalar_lea.vmem [#allocation6], %s296
        %s298 = smul.u32 8, %s25
        %v299 = vld [vmem:[%s267] sm:$0xff]
        %v300 = vld [vmem:[%s267 + $0x8] sm:$0xff]
        %v301 = vld [vmem:[%s267 + $0x10] sm:$0xff]
        %v302 = vld [vmem:[%s267 + $0x18] sm:$0xff]
        %v303 = vld [vmem:[%s267 + $0x20] sm:$0xff]
        %v304 = vld [vmem:[%s267 + $0x28] sm:$0xff]
        %v305 = vld [vmem:[%s267 + $0x30] sm:$0xff]
        %v306 = vld [vmem:[%s267 + $0x38] sm:$0xff]
        %v307 = vld [vmem:[%s2] sm:$0x1]
        %v309 = vlaneseq
        %v310 = vshrl.u32 %v309, 7
        %v311 = vsub.s32 0, %v310
        %v312 = vrot.slane %v307, %v311
        %v314 = vmul.f32 %v299, %v312
        %v315 = vmul.f32 %v300, %v312
        %v316 = vmul.f32 %v301, %v312
        %v317 = vmul.f32 %v302, %v312
        %v318 = vmul.f32 %v303, %v312
        %v319 = vmul.f32 %v304, %v312
        %v320 = vmul.f32 %v305, %v312
        %v321 = vmul.f32 %v306, %v312
        %vm322 = vcmask 261120
        %v323 = vsel %vm322, %v314, 0.0
        %324 = vadd.xlane.f32.xlu0 %v323
        %v325 = vpop.xlane.xlu0 %324
        %v326 = vsel %vm322, %v315, 0.0
        %327 = vadd.xlane.f32.xlu0 %v326
        %v328 = vpop.xlane.xlu0 %327
        %v329 = vsel %vm322, %v316, 0.0
        %330 = vadd.xlane.f32.xlu0 %v329
        %v331 = vpop.xlane.xlu0 %330
        %v332 = vsel %vm322, %v317, 0.0
        %333 = vadd.xlane.f32.xlu0 %v332
        %v334 = vpop.xlane.xlu0 %333
        %v335 = vsel %vm322, %v318, 0.0
        %336 = vadd.xlane.f32.xlu0 %v335
        %v337 = vpop.xlane.xlu0 %336
        %v338 = vsel %vm322, %v319, 0.0
        %339 = vadd.xlane.f32.xlu0 %v338
        %v340 = vpop.xlane.xlu0 %339
        %v341 = vsel %vm322, %v320, 0.0
        %342 = vadd.xlane.f32.xlu0 %v341
        %v343 = vpop.xlane.xlu0 %342
        %v344 = vsel %vm322, %v321, 0.0
        %345 = vadd.xlane.f32.xlu0 %v344
        %v346 = vpop.xlane.xlu0 %345
        %s347 = sld [smem:[#allocation2]]
        %v348 = vstv %s347
        %v349 = vadd.f32 %v325, %v348
        %v350 = vadd.f32 %v328, %v348
        %v351 = vadd.f32 %v331, %v348
        %v352 = vadd.f32 %v334, %v348
        %v353 = vadd.f32 %v337, %v348
        %v354 = vadd.f32 %v340, %v348
        %v355 = vadd.f32 %v343, %v348
        %v356 = vadd.f32 %v346, %v348
        %v365 = vlaneseq
        %v366 = vand.u32 %v365, 127
        %v367 = vlaneseq
        %v368 = vshrl.u32 %v367, 7
        %v369 = vsub.s32 %v366, %v368
        %v370 = vrot.slane %v349, %v369
        %v371 = vlaneseq
        %v372 = vshrl.u32 %v371, 7
        %v373 = vsub.s32 %v366, %v372
        %v374 = vrot.slane %v350, %v373
        %v375 = vlaneseq
        %v376 = vshrl.u32 %v375, 7
        %v377 = vsub.s32 %v366, %v376
        %v378 = vrot.slane %v351, %v377
        %v379 = vlaneseq
        %v380 = vshrl.u32 %v379, 7
        %v381 = vsub.s32 %v366, %v380
        %v382 = vrot.slane %v352, %v381
        %v383 = vlaneseq
        %v384 = vshrl.u32 %v383, 7
        %v385 = vsub.s32 %v366, %v384
        %v386 = vrot.slane %v353, %v385
        %v387 = vlaneseq
        %v388 = vshrl.u32 %v387, 7
        %v389 = vsub.s32 %v366, %v388
        %v390 = vrot.slane %v354, %v389
        %v391 = vlaneseq
        %v392 = vshrl.u32 %v391, 7
        %v393 = vsub.s32 %v366, %v392
        %v394 = vrot.slane %v355, %v393
        %v395 = vlaneseq
        %v396 = vshrl.u32 %v395, 7
        %v397 = vsub.s32 %v366, %v396
        %v398 = vrot.slane %v356, %v397
        %vm399 = vcmask 1041409
        %v400 = vsel %vm399, %v374, %v370
        %vm401 = vcmask 1042434
        %v402 = vsel %vm401, %v378, %v400
        %vm403 = vcmask 1043459
        %v404 = vsel %vm403, %v382, %v402
        %vm405 = vcmask 1044484
        %v406 = vsel %vm405, %v386, %v404
        %vm407 = vcmask 1045509
        %v408 = vsel %vm407, %v390, %v406
        %vm409 = vcmask 1046534
        %v410 = vsel %vm409, %v394, %v408
        %vm411 = vcmask 1047559
        %v412 = vsel %vm411, %v398, %v410
        %vm414 = vcmask 64512
        %v415 = vsel %vm414, %v412, -inf
        %416 = vmax.xlane.f32.xlu0 %v415
        %v417 = vpop.xlane.xlu0 %416
        %v419 = vlaneseq
        %v420 = vshrl.u32 %v419, 7
        %v421 = vsub.s32 0, %v420
        %v422 = vrot.slane %v417, %v421
        %v423 = vlaneseq
        %v424 = vshrl.u32 %v423, 7
        %v425 = vsub.s32 1, %v424
        %v426 = vrot.slane %v417, %v425
        %v427 = vlaneseq
        %v428 = vshrl.u32 %v427, 7
        %v429 = vsub.s32 2, %v428
        %v430 = vrot.slane %v417, %v429
        %v431 = vlaneseq
        %v432 = vshrl.u32 %v431, 7
        %v433 = vsub.s32 3, %v432
        %v434 = vrot.slane %v417, %v433
        %v435 = vlaneseq
        %v436 = vshrl.u32 %v435, 7
        %v437 = vsub.s32 4, %v436
        %v438 = vrot.slane %v417, %v437
        %v439 = vlaneseq
        %v440 = vshrl.u32 %v439, 7
        %v441 = vsub.s32 5, %v440
        %v442 = vrot.slane %v417, %v441
        %v443 = vlaneseq
        %v444 = vshrl.u32 %v443, 7
        %v445 = vsub.s32 6, %v444
        %v446 = vrot.slane %v417, %v445
        %v447 = vlaneseq
        %v448 = vshrl.u32 %v447, 7
        %v449 = vsub.s32 7, %v448
        %v450 = vrot.slane %v417, %v449
        %v459 = vsub.f32 %v349, %v422
        %v460 = vsub.f32 %v350, %v426
        %v461 = vsub.f32 %v351, %v430
        %v462 = vsub.f32 %v352, %v434
        %v463 = vsub.f32 %v353, %v438
        %v464 = vsub.f32 %v354, %v442
        %v465 = vsub.f32 %v355, %v446
        %v466 = vsub.f32 %v356, %v450
        %v467 = vmul.f32 %v459, 1.442695
        %v468 = vpow.pop %v467
        %v469 = vmul.f32 %v460, 1.442695
        %v470 = vpow.pop %v469
        %v471 = vmul.f32 %v461, 1.442695
        %v472 = vpow.pop %v471
        %v473 = vmul.f32 %v462, 1.442695
        %v474 = vpow.pop %v473
        %v475 = vmul.f32 %v463, 1.442695
        %v476 = vpow.pop %v475
        %v477 = vmul.f32 %v464, 1.442695
        %v478 = vpow.pop %v477
        %v479 = vmul.f32 %v465, 1.442695
        %v480 = vpow.pop %v479
        %v481 = vmul.f32 %v466, 1.442695
        %v482 = vpow.pop %v481
        %491 = vset.pattern.permute.xlu0 0
        %492 = vperm.xlu0 %491, %v468
        %v493 = vpop.permute.xlu0 %492
        %494 = vset.pattern.permute.xlu0 0
        %495 = vperm.xlu0 %494, %v470
        %v496 = vpop.permute.xlu0 %495
        %497 = vset.pattern.permute.xlu0 0
        %498 = vperm.xlu0 %497, %v472
        %v499 = vpop.permute.xlu0 %498
        %500 = vset.pattern.permute.xlu0 0
        %501 = vperm.xlu0 %500, %v474
        %v502 = vpop.permute.xlu0 %501
        %503 = vset.pattern.permute.xlu0 0
        %504 = vperm.xlu0 %503, %v476
        %v505 = vpop.permute.xlu0 %504
        %506 = vset.pattern.permute.xlu0 0
        %507 = vperm.xlu0 %506, %v478
        %v508 = vpop.permute.xlu0 %507
        %509 = vset.pattern.permute.xlu0 0
        %510 = vperm.xlu0 %509, %v480
        %v511 = vpop.permute.xlu0 %510
        %512 = vset.pattern.permute.xlu0 0
        %513 = vperm.xlu0 %512, %v482
        %v514 = vpop.permute.xlu0 %513
        %v515 = vlaneseq
        %v516 = vshrl.u32 %v515, 7
        %v517 = vsub.s32 %v366, %v516
        %v518 = vrot.slane %v493, %v517
        %v519 = vlaneseq
        %v520 = vshrl.u32 %v519, 7
        %v521 = vsub.s32 %v366, %v520
        %v522 = vrot.slane %v496, %v521
        %v523 = vlaneseq
        %v524 = vshrl.u32 %v523, 7
        %v525 = vsub.s32 %v366, %v524
        %v526 = vrot.slane %v499, %v525
        %v527 = vlaneseq
        %v528 = vshrl.u32 %v527, 7
        %v529 = vsub.s32 %v366, %v528
        %v530 = vrot.slane %v502, %v529
        %v531 = vlaneseq
        %v532 = vshrl.u32 %v531, 7
        %v533 = vsub.s32 %v366, %v532
        %v534 = vrot.slane %v505, %v533
        %v535 = vlaneseq
        %v536 = vshrl.u32 %v535, 7
        %v537 = vsub.s32 %v366, %v536
        %v538 = vrot.slane %v508, %v537
        %v539 = vlaneseq
        %v540 = vshrl.u32 %v539, 7
        %v541 = vsub.s32 %v366, %v540
        %v542 = vrot.slane %v511, %v541
        %v543 = vlaneseq
        %v544 = vshrl.u32 %v543, 7
        %v545 = vsub.s32 %v366, %v544
        %v546 = vrot.slane %v514, %v545
        %v547 = vsel %vm399, %v522, %v518
        %v548 = vsel %vm401, %v526, %v547
        %v549 = vsel %vm403, %v530, %v548
        %v550 = vsel %vm405, %v534, %v549
        %v551 = vsel %vm407, %v538, %v550
        %v552 = vsel %vm409, %v542, %v551
        %v553 = vsel %vm411, %v546, %v552
        %v555 = vsel %vm414, %v553, 0.0
        %556 = vadd.xlane.f32.xlu0 %v555
        %v557 = vpop.xlane.xlu0 %556
        %v558 = vrcp.pop %v557
        %v560 = vlaneseq
        %v561 = vshrl.u32 %v560, 7
        %v562 = vsub.s32 0, %v561
        %v563 = vrot.slane %v558, %v562
        %v564 = vlaneseq
        %v565 = vshrl.u32 %v564, 7
        %v566 = vsub.s32 1, %v565
        %v567 = vrot.slane %v558, %v566
        %v568 = vlaneseq
        %v569 = vshrl.u32 %v568, 7
        %v570 = vsub.s32 2, %v569
        %v571 = vrot.slane %v558, %v570
        %v572 = vlaneseq
        %v573 = vshrl.u32 %v572, 7
        %v574 = vsub.s32 3, %v573
        %v575 = vrot.slane %v558, %v574
        %v576 = vlaneseq
        %v577 = vshrl.u32 %v576, 7
        %v578 = vsub.s32 4, %v577
        %v579 = vrot.slane %v558, %v578
        %v580 = vlaneseq
        %v581 = vshrl.u32 %v580, 7
        %v582 = vsub.s32 5, %v581
        %v583 = vrot.slane %v558, %v582
        %v584 = vlaneseq
        %v585 = vshrl.u32 %v584, 7
        %v586 = vsub.s32 6, %v585
        %v587 = vrot.slane %v558, %v586
        %v588 = vlaneseq
        %v589 = vshrl.u32 %v588, 7
        %v590 = vsub.s32 7, %v589
        %v591 = vrot.slane %v558, %v590
        %v600 = vmul.f32 %v468, %v563
        %v601 = vmul.f32 %v470, %v567
        %v602 = vmul.f32 %v472, %v571
        %v603 = vmul.f32 %v474, %v575
        %v604 = vmul.f32 %v476, %v579
        %v605 = vmul.f32 %v478, %v583
        %v606 = vmul.f32 %v480, %v587
        %v607 = vmul.f32 %v482, %v591
        %609 = vset.pattern.permute.xlu0 0
        %610 = vperm.xlu0 %609, %v600
        %v611 = vpop.permute.xlu0 %610
        %v612 = vlaneseq
        %v613 = vshrl.u32 %v612, 7
        %v614 = vsub.s32 %v366, %v613
        %v615 = vrot.slane %v611, %v614
        %v616 = vsel %vm414, %v615, 0
        %618 = vmatprep.subr.mxu0 0.0
        %619 = vmatpush1.msra.mxu0 %v299
        %620 = vmatprep.subr.mxu0 0.0
        %621 = vmatpush1.msra.mxu0 0.0
        %622 = vmatprep.subr.mxu0 0.0
        %623 = vmatpush1.msra.mxu0 0.0
        %624 = vmatprep.subr.mxu0 0.0
        %625 = vmatpush1.msra.mxu0 0.0
        %626 = vmatprep.subr.mxu0 0.0
        %627 = vmatpush1.msra.mxu0 0.0
        %628 = vmatprep.subr.mxu0 0.0
        %629 = vmatpush1.msra.mxu0 0.0
        %630 = vmatprep.subr.mxu0 0.0
        %631 = vmatpush1.msra.mxu0 0.0
        %632 = vmatprep.subr.mxu0 0.0
        %633 = vmatpush1.msra.mxu0 0.0
        %634 = vmatprep.subr.mxu0 0.0
        %635 = vmatpush1.msra.mxu0 0.0
        %636 = vmatprep.subr.mxu0 0.0
        %637 = vmatpush1.msra.mxu0 0.0
        %638 = vmatprep.subr.mxu0 0.0
        %639 = vmatpush1.msra.mxu0 0.0
        %640 = vmatprep.subr.mxu0 0.0
        %641 = vmatpush1.msra.mxu0 0.0
        %642 = vmatprep.subr.mxu0 0.0
        %643 = vmatpush1.msra.mxu0 0.0
        %644 = vmatprep.subr.mxu0 0.0
        %645 = vmatpush1.msra.mxu0 0.0
        %646 = vmatprep.subr.mxu0 0.0
        %647 = vmatpush1.msra.mxu0 0.0
        %648 = vmatprep.subr.mxu0 0.0
        %649 = vmatpush1.msra.mxu0 0.0
        %650 = vmatprep.subr.mxu0 0.0
        %651 = vmatpush1.msra.mxu0 0.0
        %652 = vmatprep.subr.mxu0 0.0
        %653 = vmatpush1.msra.mxu0 0.0
        %654 = vmatprep.subr.mxu0 0.0
        %655 = vmatpush1.msra.mxu0 0.0
        %656 = vmatprep.subr.mxu0 0.0
        %657 = vmatpush1.msra.mxu0 0.0
        %658 = vmatprep.subr.mxu0 0.0
        %659 = vmatpush1.msra.mxu0 0.0
        %660 = vmatprep.subr.mxu0 0.0
        %661 = vmatpush1.msra.mxu0 0.0
        %662 = vmatprep.subr.mxu0 0.0
        %663 = vmatpush1.msra.mxu0 0.0
        %664 = vmatprep.subr.mxu0 0.0
        %665 = vmatpush1.msra.mxu0 0.0
        %666 = vmatprep.subr.mxu0 0.0
        %667 = vmatpush1.msra.mxu0 0.0
        %668 = vmatprep.subr.mxu0 0.0
        %669 = vmatpush1.msra.mxu0 0.0
        %670 = vmatprep.subr.mxu0 0.0
        %671 = vmatpush1.msra.mxu0 0.0
        %672 = vmatprep.subr.mxu0 0.0
        %673 = vmatpush1.msra.mxu0 0.0
        %674 = vmatprep.subr.mxu0 0.0
        %675 = vmatpush1.msra.mxu0 0.0
        %676 = vmatprep.subr.mxu0 0.0
        %677 = vmatpush1.msra.mxu0 0.0
        %678 = vmatprep.subr.mxu0 0.0
        %679 = vmatpush1.msra.mxu0 0.0
        %680 = vmatprep.subr.mxu0 0.0
        %681 = vmatpush1.msra.mxu0 0.0
        %682 = vmatprep.mubr.f32.mxu0 0.0
        %683 = vmatmul.mubr.f32.gmra.mrb[0].mxu0 %v616
        %v684 = vpop.f32.mrb[0].mxu0
        %v685 = vadd.f32 0.0, %v684
        %v686 = vpop.f32.mrb[0].mxu0
        %687 = vdwg.mxu0
        %689 = vset.pattern.permute.xlu0 0
        %690 = vperm.xlu0 %689, %v601
        %v691 = vpop.permute.xlu0 %690
        %v692 = vlaneseq
        %v693 = vshrl.u32 %v692, 7
        %v694 = vsub.s32 %v366, %v693
        %v695 = vrot.slane %v691, %v694
        %v696 = vsel %vm414, %v695, 0
        %698 = vmatprep.subr.mxu0 0.0
        %699 = vmatpush1.msra.mxu0 %v300
        %700 = vmatprep.subr.mxu0 0.0
        %701 = vmatpush1.msra.mxu0 0.0
        %702 = vmatprep.subr.mxu0 0.0
        %703 = vmatpush1.msra.mxu0 0.0
        %704 = vmatprep.subr.mxu0 0.0
        %705 = vmatpush1.msra.mxu0 0.0
        %706 = vmatprep.subr.mxu0 0.0
        %707 = vmatpush1.msra.mxu0 0.0
        %708 = vmatprep.subr.mxu0 0.0
        %709 = vmatpush1.msra.mxu0 0.0
        %710 = vmatprep.subr.mxu0 0.0
        %711 = vmatpush1.msra.mxu0 0.0
        %712 = vmatprep.subr.mxu0 0.0
        %713 = vmatpush1.msra.mxu0 0.0
        %714 = vmatprep.subr.mxu0 0.0
        %715 = vmatpush1.msra.mxu0 0.0
        %716 = vmatprep.subr.mxu0 0.0
        %717 = vmatpush1.msra.mxu0 0.0
        %718 = vmatprep.subr.mxu0 0.0
        %719 = vmatpush1.msra.mxu0 0.0
        %720 = vmatprep.subr.mxu0 0.0
        %721 = vmatpush1.msra.mxu0 0.0
        %722 = vmatprep.subr.mxu0 0.0
        %723 = vmatpush1.msra.mxu0 0.0
        %724 = vmatprep.subr.mxu0 0.0
        %725 = vmatpush1.msra.mxu0 0.0
        %726 = vmatprep.subr.mxu0 0.0
        %727 = vmatpush1.msra.mxu0 0.0
        %728 = vmatprep.subr.mxu0 0.0
        %729 = vmatpush1.msra.mxu0 0.0
        %730 = vmatprep.subr.mxu0 0.0
        %731 = vmatpush1.msra.mxu0 0.0
        %732 = vmatprep.subr.mxu0 0.0
        %733 = vmatpush1.msra.mxu0 0.0
        %734 = vmatprep.subr.mxu0 0.0
        %735 = vmatpush1.msra.mxu0 0.0
        %736 = vmatprep.subr.mxu0 0.0
        %737 = vmatpush1.msra.mxu0 0.0
        %738 = vmatprep.subr.mxu0 0.0
        %739 = vmatpush1.msra.mxu0 0.0
        %740 = vmatprep.subr.mxu0 0.0
        %741 = vmatpush1.msra.mxu0 0.0
        %742 = vmatprep.subr.mxu0 0.0
        %743 = vmatpush1.msra.mxu0 0.0
        %744 = vmatprep.subr.mxu0 0.0
        %745 = vmatpush1.msra.mxu0 0.0
        %746 = vmatprep.subr.mxu0 0.0
        %747 = vmatpush1.msra.mxu0 0.0
        %748 = vmatprep.subr.mxu0 0.0
        %749 = vmatpush1.msra.mxu0 0.0
        %750 = vmatprep.subr.mxu0 0.0
        %751 = vmatpush1.msra.mxu0 0.0
        %752 = vmatprep.subr.mxu0 0.0
        %753 = vmatpush1.msra.mxu0 0.0
        %754 = vmatprep.subr.mxu0 0.0
        %755 = vmatpush1.msra.mxu0 0.0
        %756 = vmatprep.subr.mxu0 0.0
        %757 = vmatpush1.msra.mxu0 0.0
        %758 = vmatprep.subr.mxu0 0.0
        %759 = vmatpush1.msra.mxu0 0.0
        %760 = vmatprep.subr.mxu0 0.0
        %761 = vmatpush1.msra.mxu0 0.0
        %762 = vmatprep.mubr.f32.mxu0 0.0
        %763 = vmatmul.mubr.f32.gmra.mrb[0].mxu0 %v696
        %v764 = vpop.f32.mrb[0].mxu0
        %v765 = vadd.f32 0.0, %v764
        %v766 = vpop.f32.mrb[0].mxu0
        %767 = vdwg.mxu0
        %769 = vset.pattern.permute.xlu0 0
        %770 = vperm.xlu0 %769, %v602
        %v771 = vpop.permute.xlu0 %770
        %v772 = vlaneseq
        %v773 = vshrl.u32 %v772, 7
        %v774 = vsub.s32 %v366, %v773
        %v775 = vrot.slane %v771, %v774
        %v776 = vsel %vm414, %v775, 0
        %778 = vmatprep.subr.mxu0 0.0
        %779 = vmatpush1.msra.mxu0 %v301
        %780 = vmatprep.subr.mxu0 0.0
        %781 = vmatpush1.msra.mxu0 0.0
        %782 = vmatprep.subr.mxu0 0.0
        %783 = vmatpush1.msra.mxu0 0.0
        %784 = vmatprep.subr.mxu0 0.0
        %785 = vmatpush1.msra.mxu0 0.0
        %786 = vmatprep.subr.mxu0 0.0
        %787 = vmatpush1.msra.mxu0 0.0
        %788 = vmatprep.subr.mxu0 0.0
        %789 = vmatpush1.msra.mxu0 0.0
        %790 = vmatprep.subr.mxu0 0.0
        %791 = vmatpush1.msra.mxu0 0.0
        %792 = vmatprep.subr.mxu0 0.0
        %793 = vmatpush1.msra.mxu0 0.0
        %794 = vmatprep.subr.mxu0 0.0
        %795 = vmatpush1.msra.mxu0 0.0
        %796 = vmatprep.subr.mxu0 0.0
        %797 = vmatpush1.msra.mxu0 0.0
        %798 = vmatprep.subr.mxu0 0.0
        %799 = vmatpush1.msra.mxu0 0.0
        %800 = vmatprep.subr.mxu0 0.0
        %801 = vmatpush1.msra.mxu0 0.0
        %802 = vmatprep.subr.mxu0 0.0
        %803 = vmatpush1.msra.mxu0 0.0
        %804 = vmatprep.subr.mxu0 0.0
        %805 = vmatpush1.msra.mxu0 0.0
        %806 = vmatprep.subr.mxu0 0.0
        %807 = vmatpush1.msra.mxu0 0.0
        %808 = vmatprep.subr.mxu0 0.0
        %809 = vmatpush1.msra.mxu0 0.0
        %810 = vmatprep.subr.mxu0 0.0
        %811 = vmatpush1.msra.mxu0 0.0
        %812 = vmatprep.subr.mxu0 0.0
        %813 = vmatpush1.msra.mxu0 0.0
        %814 = vmatprep.subr.mxu0 0.0
        %815 = vmatpush1.msra.mxu0 0.0
        %816 = vmatprep.subr.mxu0 0.0
        %817 = vmatpush1.msra.mxu0 0.0
        %818 = vmatprep.subr.mxu0 0.0
        %819 = vmatpush1.msra.mxu0 0.0
        %820 = vmatprep.subr.mxu0 0.0
        %821 = vmatpush1.msra.mxu0 0.0
        %822 = vmatprep.subr.mxu0 0.0
        %823 = vmatpush1.msra.mxu0 0.0
        %824 = vmatprep.subr.mxu0 0.0
        %825 = vmatpush1.msra.mxu0 0.0
        %826 = vmatprep.subr.mxu0 0.0
        %827 = vmatpush1.msra.mxu0 0.0
        %828 = vmatprep.subr.mxu0 0.0
        %829 = vmatpush1.msra.mxu0 0.0
        %830 = vmatprep.subr.mxu0 0.0
        %831 = vmatpush1.msra.mxu0 0.0
        %832 = vmatprep.subr.mxu0 0.0
        %833 = vmatpush1.msra.mxu0 0.0
        %834 = vmatprep.subr.mxu0 0.0
        %835 = vmatpush1.msra.mxu0 0.0
        %836 = vmatprep.subr.mxu0 0.0
        %837 = vmatpush1.msra.mxu0 0.0
        %838 = vmatprep.subr.mxu0 0.0
        %839 = vmatpush1.msra.mxu0 0.0
        %840 = vmatprep.subr.mxu0 0.0
        %841 = vmatpush1.msra.mxu0 0.0
        %842 = vmatprep.mubr.f32.mxu0 0.0
        %843 = vmatmul.mubr.f32.gmra.mrb[0].mxu0 %v776
        %v844 = vpop.f32.mrb[0].mxu0
        %v845 = vadd.f32 0.0, %v844
        %v846 = vpop.f32.mrb[0].mxu0
        %847 = vdwg.mxu0
        %849 = vset.pattern.permute.xlu0 0
        %850 = vperm.xlu0 %849, %v603
        %v851 = vpop.permute.xlu0 %850
        %v852 = vlaneseq
        %v853 = vshrl.u32 %v852, 7
        %v854 = vsub.s32 %v366, %v853
        %v855 = vrot.slane %v851, %v854
        %v856 = vsel %vm414, %v855, 0
        %858 = vmatprep.subr.mxu0 0.0
        %859 = vmatpush1.msra.mxu0 %v302
        %860 = vmatprep.subr.mxu0 0.0
        %861 = vmatpush1.msra.mxu0 0.0
        %862 = vmatprep.subr.mxu0 0.0
        %863 = vmatpush1.msra.mxu0 0.0
        %864 = vmatprep.subr.mxu0 0.0
        %865 = vmatpush1.msra.mxu0 0.0
        %866 = vmatprep.subr.mxu0 0.0
        %867 = vmatpush1.msra.mxu0 0.0
        %868 = vmatprep.subr.mxu0 0.0
        %869 = vmatpush1.msra.mxu0 0.0
        %870 = vmatprep.subr.mxu0 0.0
        %871 = vmatpush1.msra.mxu0 0.0
        %872 = vmatprep.subr.mxu0 0.0
        %873 = vmatpush1.msra.mxu0 0.0
        %874 = vmatprep.subr.mxu0 0.0
        %875 = vmatpush1.msra.mxu0 0.0
        %876 = vmatprep.subr.mxu0 0.0
        %877 = vmatpush1.msra.mxu0 0.0
        %878 = vmatprep.subr.mxu0 0.0
        %879 = vmatpush1.msra.mxu0 0.0
        %880 = vmatprep.subr.mxu0 0.0
        %881 = vmatpush1.msra.mxu0 0.0
        %882 = vmatprep.subr.mxu0 0.0
        %883 = vmatpush1.msra.mxu0 0.0
        %884 = vmatprep.subr.mxu0 0.0
        %885 = vmatpush1.msra.mxu0 0.0
        %886 = vmatprep.subr.mxu0 0.0
        %887 = vmatpush1.msra.mxu0 0.0
        %888 = vmatprep.subr.mxu0 0.0
        %889 = vmatpush1.msra.mxu0 0.0
        %890 = vmatprep.subr.mxu0 0.0
        %891 = vmatpush1.msra.mxu0 0.0
        %892 = vmatprep.subr.mxu0 0.0
        %893 = vmatpush1.msra.mxu0 0.0
        %894 = vmatprep.subr.mxu0 0.0
        %895 = vmatpush1.msra.mxu0 0.0
        %896 = vmatprep.subr.mxu0 0.0
        %897 = vmatpush1.msra.mxu0 0.0
        %898 = vmatprep.subr.mxu0 0.0
        %899 = vmatpush1.msra.mxu0 0.0
        %900 = vmatprep.subr.mxu0 0.0
        %901 = vmatpush1.msra.mxu0 0.0
        %902 = vmatprep.subr.mxu0 0.0
        %903 = vmatpush1.msra.mxu0 0.0
        %904 = vmatprep.subr.mxu0 0.0
        %905 = vmatpush1.msra.mxu0 0.0
        %906 = vmatprep.subr.mxu0 0.0
        %907 = vmatpush1.msra.mxu0 0.0
        %908 = vmatprep.subr.mxu0 0.0
        %909 = vmatpush1.msra.mxu0 0.0
        %910 = vmatprep.subr.mxu0 0.0
        %911 = vmatpush1.msra.mxu0 0.0
        %912 = vmatprep.subr.mxu0 0.0
        %913 = vmatpush1.msra.mxu0 0.0
        %914 = vmatprep.subr.mxu0 0.0
        %915 = vmatpush1.msra.mxu0 0.0
        %916 = vmatprep.subr.mxu0 0.0
        %917 = vmatpush1.msra.mxu0 0.0
        %918 = vmatprep.subr.mxu0 0.0
        %919 = vmatpush1.msra.mxu0 0.0
        %920 = vmatprep.subr.mxu0 0.0
        %921 = vmatpush1.msra.mxu0 0.0
        %922 = vmatprep.mubr.f32.mxu0 0.0
        %923 = vmatmul.mubr.f32.gmra.mrb[0].mxu0 %v856
        %v924 = vpop.f32.mrb[0].mxu0
        %v925 = vadd.f32 0.0, %v924
        %v926 = vpop.f32.mrb[0].mxu0
        %927 = vdwg.mxu0
        %929 = vset.pattern.permute.xlu0 0
        %930 = vperm.xlu0 %929, %v604
        %v931 = vpop.permute.xlu0 %930
        %v932 = vlaneseq
        %v933 = vshrl.u32 %v932, 7
        %v934 = vsub.s32 %v366, %v933
        %v935 = vrot.slane %v931, %v934
        %v936 = vsel %vm414, %v935, 0
        %938 = vmatprep.subr.mxu0 0.0
        %939 = vmatpush1.msra.mxu0 %v303
        %940 = vmatprep.subr.mxu0 0.0
        %941 = vmatpush1.msra.mxu0 0.0
        %942 = vmatprep.subr.mxu0 0.0
        %943 = vmatpush1.msra.mxu0 0.0
        %944 = vmatprep.subr.mxu0 0.0
        %945 = vmatpush1.msra.mxu0 0.0
        %946 = vmatprep.subr.mxu0 0.0
        %947 = vmatpush1.msra.mxu0 0.0
        %948 = vmatprep.subr.mxu0 0.0
        %949 = vmatpush1.msra.mxu0 0.0
        %950 = vmatprep.subr.mxu0 0.0
        %951 = vmatpush1.msra.mxu0 0.0
        %952 = vmatprep.subr.mxu0 0.0
        %953 = vmatpush1.msra.mxu0 0.0
        %954 = vmatprep.subr.mxu0 0.0
        %955 = vmatpush1.msra.mxu0 0.0
        %956 = vmatprep.subr.mxu0 0.0
        %957 = vmatpush1.msra.mxu0 0.0
        %958 = vmatprep.subr.mxu0 0.0
        %959 = vmatpush1.msra.mxu0 0.0
        %960 = vmatprep.subr.mxu0 0.0
        %961 = vmatpush1.msra.mxu0 0.0
        %962 = vmatprep.subr.mxu0 0.0
        %963 = vmatpush1.msra.mxu0 0.0
        %964 = vmatprep.subr.mxu0 0.0
        %965 = vmatpush1.msra.mxu0 0.0
        %966 = vmatprep.subr.mxu0 0.0
        %967 = vmatpush1.msra.mxu0 0.0
        %968 = vmatprep.subr.mxu0 0.0
        %969 = vmatpush1.msra.mxu0 0.0
        %970 = vmatprep.subr.mxu0 0.0
        %971 = vmatpush1.msra.mxu0 0.0
        %972 = vmatprep.subr.mxu0 0.0
        %973 = vmatpush1.msra.mxu0 0.0
        %974 = vmatprep.subr.mxu0 0.0
        %975 = vmatpush1.msra.mxu0 0.0
        %976 = vmatprep.subr.mxu0 0.0
        %977 = vmatpush1.msra.mxu0 0.0
        %978 = vmatprep.subr.mxu0 0.0
        %979 = vmatpush1.msra.mxu0 0.0
        %980 = vmatprep.subr.mxu0 0.0
        %981 = vmatpush1.msra.mxu0 0.0
        %982 = vmatprep.subr.mxu0 0.0
        %983 = vmatpush1.msra.mxu0 0.0
        %984 = vmatprep.subr.mxu0 0.0
        %985 = vmatpush1.msra.mxu0 0.0
        %986 = vmatprep.subr.mxu0 0.0
        %987 = vmatpush1.msra.mxu0 0.0
        %988 = vmatprep.subr.mxu0 0.0
        %989 = vmatpush1.msra.mxu0 0.0
        %990 = vmatprep.subr.mxu0 0.0
        %991 = vmatpush1.msra.mxu0 0.0
        %992 = vmatprep.subr.mxu0 0.0
        %993 = vmatpush1.msra.mxu0 0.0
        %994 = vmatprep.subr.mxu0 0.0
        %995 = vmatpush1.msra.mxu0 0.0
        %996 = vmatprep.subr.mxu0 0.0
        %997 = vmatpush1.msra.mxu0 0.0
        %998 = vmatprep.subr.mxu0 0.0
        %999 = vmatpush1.msra.mxu0 0.0
        %1000 = vmatprep.subr.mxu0 0.0
        %1001 = vmatpush1.msra.mxu0 0.0
        %1002 = vmatprep.mubr.f32.mxu0 0.0
        %1003 = vmatmul.mubr.f32.gmra.mrb[0].mxu0 %v936
        %v1004 = vpop.f32.mrb[0].mxu0
        %v1005 = vadd.f32 0.0, %v1004
        %v1006 = vpop.f32.mrb[0].mxu0
        %1007 = vdwg.mxu0
        %1009 = vset.pattern.permute.xlu0 0
        %1010 = vperm.xlu0 %1009, %v605
        %v1011 = vpop.permute.xlu0 %1010
        %v1012 = vlaneseq
        %v1013 = vshrl.u32 %v1012, 7
        %v1014 = vsub.s32 %v366, %v1013
        %v1015 = vrot.slane %v1011, %v1014
        %v1016 = vsel %vm414, %v1015, 0
        %1018 = vmatprep.subr.mxu0 0.0
        %1019 = vmatpush1.msra.mxu0 %v304
        %1020 = vmatprep.subr.mxu0 0.0
        %1021 = vmatpush1.msra.mxu0 0.0
        %1022 = vmatprep.subr.mxu0 0.0
        %1023 = vmatpush1.msra.mxu0 0.0
        %1024 = vmatprep.subr.mxu0 0.0
        %1025 = vmatpush1.msra.mxu0 0.0
        %1026 = vmatprep.subr.mxu0 0.0
        %1027 = vmatpush1.msra.mxu0 0.0
        %1028 = vmatprep.subr.mxu0 0.0
        %1029 = vmatpush1.msra.mxu0 0.0
        %1030 = vmatprep.subr.mxu0 0.0
        %1031 = vmatpush1.msra.mxu0 0.0
        %1032 = vmatprep.subr.mxu0 0.0
        %1033 = vmatpush1.msra.mxu0 0.0
        %1034 = vmatprep.subr.mxu0 0.0
        %1035 = vmatpush1.msra.mxu0 0.0
        %1036 = vmatprep.subr.mxu0 0.0
        %1037 = vmatpush1.msra.mxu0 0.0
        %1038 = vmatprep.subr.mxu0 0.0
        %1039 = vmatpush1.msra.mxu0 0.0
        %1040 = vmatprep.subr.mxu0 0.0
        %1041 = vmatpush1.msra.mxu0 0.0
        %1042 = vmatprep.subr.mxu0 0.0
        %1043 = vmatpush1.msra.mxu0 0.0
        %1044 = vmatprep.subr.mxu0 0.0
        %1045 = vmatpush1.msra.mxu0 0.0
        %1046 = vmatprep.subr.mxu0 0.0
        %1047 = vmatpush1.msra.mxu0 0.0
        %1048 = vmatprep.subr.mxu0 0.0
        %1049 = vmatpush1.msra.mxu0 0.0
        %1050 = vmatprep.subr.mxu0 0.0
        %1051 = vmatpush1.msra.mxu0 0.0
        %1052 = vmatprep.subr.mxu0 0.0
        %1053 = vmatpush1.msra.mxu0 0.0
        %1054 = vmatprep.subr.mxu0 0.0
        %1055 = vmatpush1.msra.mxu0 0.0
        %1056 = vmatprep.subr.mxu0 0.0
        %1057 = vmatpush1.msra.mxu0 0.0
        %1058 = vmatprep.subr.mxu0 0.0
        %1059 = vmatpush1.msra.mxu0 0.0
        %1060 = vmatprep.subr.mxu0 0.0
        %1061 = vmatpush1.msra.mxu0 0.0
        %1062 = vmatprep.subr.mxu0 0.0
        %1063 = vmatpush1.msra.mxu0 0.0
        %1064 = vmatprep.subr.mxu0 0.0
        %1065 = vmatpush1.msra.mxu0 0.0
        %1066 = vmatprep.subr.mxu0 0.0
        %1067 = vmatpush1.msra.mxu0 0.0
        %1068 = vmatprep.subr.mxu0 0.0
        %1069 = vmatpush1.msra.mxu0 0.0
        %1070 = vmatprep.subr.mxu0 0.0
        %1071 = vmatpush1.msra.mxu0 0.0
        %1072 = vmatprep.subr.mxu0 0.0
        %1073 = vmatpush1.msra.mxu0 0.0
        %1074 = vmatprep.subr.mxu0 0.0
        %1075 = vmatpush1.msra.mxu0 0.0
        %1076 = vmatprep.subr.mxu0 0.0
        %1077 = vmatpush1.msra.mxu0 0.0
        %1078 = vmatprep.subr.mxu0 0.0
        %1079 = vmatpush1.msra.mxu0 0.0
        %1080 = vmatprep.subr.mxu0 0.0
        %1081 = vmatpush1.msra.mxu0 0.0
        %1082 = vmatprep.mubr.f32.mxu0 0.0
        %1083 = vmatmul.mubr.f32.gmra.mrb[0].mxu0 %v1016
        %v1084 = vpop.f32.mrb[0].mxu0
        %v1085 = vadd.f32 0.0, %v1084
        %v1086 = vpop.f32.mrb[0].mxu0
        %1087 = vdwg.mxu0
        %1089 = vset.pattern.permute.xlu0 0
        %1090 = vperm.xlu0 %1089, %v606
        %v1091 = vpop.permute.xlu0 %1090
        %v1092 = vlaneseq
        %v1093 = vshrl.u32 %v1092, 7
        %v1094 = vsub.s32 %v366, %v1093
        %v1095 = vrot.slane %v1091, %v1094
        %v1096 = vsel %vm414, %v1095, 0
        %1098 = vmatprep.subr.mxu0 0.0
        %1099 = vmatpush1.msra.mxu0 %v305
        %1100 = vmatprep.subr.mxu0 0.0
        %1101 = vmatpush1.msra.mxu0 0.0
        %1102 = vmatprep.subr.mxu0 0.0
        %1103 = vmatpush1.msra.mxu0 0.0
        %1104 = vmatprep.subr.mxu0 0.0
        %1105 = vmatpush1.msra.mxu0 0.0
        %1106 = vmatprep.subr.mxu0 0.0
        %1107 = vmatpush1.msra.mxu0 0.0
        %1108 = vmatprep.subr.mxu0 0.0
        %1109 = vmatpush1.msra.mxu0 0.0
        %1110 = vmatprep.subr.mxu0 0.0
        %1111 = vmatpush1.msra.mxu0 0.0
        %1112 = vmatprep.subr.mxu0 0.0
        %1113 = vmatpush1.msra.mxu0 0.0
        %1114 = vmatprep.subr.mxu0 0.0
        %1115 = vmatpush1.msra.mxu0 0.0
        %1116 = vmatprep.subr.mxu0 0.0
        %1117 = vmatpush1.msra.mxu0 0.0
        %1118 = vmatprep.subr.mxu0 0.0
        %1119 = vmatpush1.msra.mxu0 0.0
        %1120 = vmatprep.subr.mxu0 0.0
        %1121 = vmatpush1.msra.mxu0 0.0
        %1122 = vmatprep.subr.mxu0 0.0
        %1123 = vmatpush1.msra.mxu0 0.0
        %1124 = vmatprep.subr.mxu0 0.0
        %1125 = vmatpush1.msra.mxu0 0.0
        %1126 = vmatprep.subr.mxu0 0.0
        %1127 = vmatpush1.msra.mxu0 0.0
        %1128 = vmatprep.subr.mxu0 0.0
        %1129 = vmatpush1.msra.mxu0 0.0
        %1130 = vmatprep.subr.mxu0 0.0
        %1131 = vmatpush1.msra.mxu0 0.0
        %1132 = vmatprep.subr.mxu0 0.0
        %1133 = vmatpush1.msra.mxu0 0.0
        %1134 = vmatprep.subr.mxu0 0.0
        %1135 = vmatpush1.msra.mxu0 0.0
        %1136 = vmatprep.subr.mxu0 0.0
        %1137 = vmatpush1.msra.mxu0 0.0
        %1138 = vmatprep.subr.mxu0 0.0
        %1139 = vmatpush1.msra.mxu0 0.0
        %1140 = vmatprep.subr.mxu0 0.0
        %1141 = vmatpush1.msra.mxu0 0.0
        %1142 = vmatprep.subr.mxu0 0.0
        %1143 = vmatpush1.msra.mxu0 0.0
        %1144 = vmatprep.subr.mxu0 0.0
        %1145 = vmatpush1.msra.mxu0 0.0
        %1146 = vmatprep.subr.mxu0 0.0
        %1147 = vmatpush1.msra.mxu0 0.0
        %1148 = vmatprep.subr.mxu0 0.0
        %1149 = vmatpush1.msra.mxu0 0.0
        %1150 = vmatprep.subr.mxu0 0.0
        %1151 = vmatpush1.msra.mxu0 0.0
        %1152 = vmatprep.subr.mxu0 0.0
        %1153 = vmatpush1.msra.mxu0 0.0
        %1154 = vmatprep.subr.mxu0 0.0
        %1155 = vmatpush1.msra.mxu0 0.0
        %1156 = vmatprep.subr.mxu0 0.0
        %1157 = vmatpush1.msra.mxu0 0.0
        %1158 = vmatprep.subr.mxu0 0.0
        %1159 = vmatpush1.msra.mxu0 0.0
        %1160 = vmatprep.subr.mxu0 0.0
        %1161 = vmatpush1.msra.mxu0 0.0
        %1162 = vmatprep.mubr.f32.mxu0 0.0
        %1163 = vmatmul.mubr.f32.gmra.mrb[0].mxu0 %v1096
        %v1164 = vpop.f32.mrb[0].mxu0
        %v1165 = vadd.f32 0.0, %v1164
        %v1166 = vpop.f32.mrb[0].mxu0
        %1167 = vdwg.mxu0
        %1169 = vset.pattern.permute.xlu0 0
        %1170 = vperm.xlu0 %1169, %v607
        %v1171 = vpop.permute.xlu0 %1170
        %v1172 = vlaneseq
        %v1173 = vshrl.u32 %v1172, 7
        %v1174 = vsub.s32 %v366, %v1173
        %v1175 = vrot.slane %v1171, %v1174
        %v1176 = vsel %vm414, %v1175, 0
        %1178 = vmatprep.subr.mxu0 0.0
        %1179 = vmatpush1.msra.mxu0 %v306
        %1180 = vmatprep.subr.mxu0 0.0
        %1181 = vmatpush1.msra.mxu0 0.0
        %1182 = vmatprep.subr.mxu0 0.0
        %1183 = vmatpush1.msra.mxu0 0.0
        %1184 = vmatprep.subr.mxu0 0.0
        %1185 = vmatpush1.msra.mxu0 0.0
        %1186 = vmatprep.subr.mxu0 0.0
        %1187 = vmatpush1.msra.mxu0 0.0
        %1188 = vmatprep.subr.mxu0 0.0
        %1189 = vmatpush1.msra.mxu0 0.0
        %1190 = vmatprep.subr.mxu0 0.0
        %1191 = vmatpush1.msra.mxu0 0.0
        %1192 = vmatprep.subr.mxu0 0.0
        %1193 = vmatpush1.msra.mxu0 0.0
        %1194 = vmatprep.subr.mxu0 0.0
        %1195 = vmatpush1.msra.mxu0 0.0
        %1196 = vmatprep.subr.mxu0 0.0
        %1197 = vmatpush1.msra.mxu0 0.0
        %1198 = vmatprep.subr.mxu0 0.0
        %1199 = vmatpush1.msra.mxu0 0.0
        %1200 = vmatprep.subr.mxu0 0.0
        %1201 = vmatpush1.msra.mxu0 0.0
        %1202 = vmatprep.subr.mxu0 0.0
        %1203 = vmatpush1.msra.mxu0 0.0
        %1204 = vmatprep.subr.mxu0 0.0
        %1205 = vmatpush1.msra.mxu0 0.0
        %1206 = vmatprep.subr.mxu0 0.0
        %1207 = vmatpush1.msra.mxu0 0.0
        %1208 = vmatprep.subr.mxu0 0.0
        %1209 = vmatpush1.msra.mxu0 0.0
        %1210 = vmatprep.subr.mxu0 0.0
        %1211 = vmatpush1.msra.mxu0 0.0
        %1212 = vmatprep.subr.mxu0 0.0
        %1213 = vmatpush1.msra.mxu0 0.0
        %1214 = vmatprep.subr.mxu0 0.0
        %1215 = vmatpush1.msra.mxu0 0.0
        %1216 = vmatprep.subr.mxu0 0.0
        %1217 = vmatpush1.msra.mxu0 0.0
        %1218 = vmatprep.subr.mxu0 0.0
        %1219 = vmatpush1.msra.mxu0 0.0
        %1220 = vmatprep.subr.mxu0 0.0
        %1221 = vmatpush1.msra.mxu0 0.0
        %1222 = vmatprep.subr.mxu0 0.0
        %1223 = vmatpush1.msra.mxu0 0.0
        %1224 = vmatprep.subr.mxu0 0.0
        %1225 = vmatpush1.msra.mxu0 0.0
        %1226 = vmatprep.subr.mxu0 0.0
        %1227 = vmatpush1.msra.mxu0 0.0
        %1228 = vmatprep.subr.mxu0 0.0
        %1229 = vmatpush1.msra.mxu0 0.0
        %1230 = vmatprep.subr.mxu0 0.0
        %1231 = vmatpush1.msra.mxu0 0.0
        %1232 = vmatprep.subr.mxu0 0.0
        %1233 = vmatpush1.msra.mxu0 0.0
        %1234 = vmatprep.subr.mxu0 0.0
        %1235 = vmatpush1.msra.mxu0 0.0
        %1236 = vmatprep.subr.mxu0 0.0
        %1237 = vmatpush1.msra.mxu0 0.0
        %1238 = vmatprep.subr.mxu0 0.0
        %1239 = vmatpush1.msra.mxu0 0.0
        %1240 = vmatprep.subr.mxu0 0.0
        %1241 = vmatpush1.msra.mxu0 0.0
        %1242 = vmatprep.mubr.f32.mxu0 0.0
        %1243 = vmatmul.mubr.f32.gmra.mrb[0].mxu0 %v1176
        %v1244 = vpop.f32.mrb[0].mxu0
        %v1245 = vadd.f32 0.0, %v1244
        %v1246 = vpop.f32.mrb[0].mxu0
        %1247 = vdwg.mxu0
        %v1248 = vld [vmem:[%s3] sm:$0xff]
        %v1249 = vld [vmem:[%s3 + $0x8] sm:$0xff]
        %v1250 = vld [vmem:[%s3 + $0x10] sm:$0xff]
        %v1251 = vld [vmem:[%s3 + $0x18] sm:$0xff]
        %v1252 = vld [vmem:[%s4] sm:$0x1]
        %v1254 = vlaneseq
        %v1255 = vshrl.u32 %v1254, 7
        %v1256 = vsub.s32 0, %v1255
        %v1257 = vrot.slane %v1252, %v1256
        %v1267 = vrot.slane %v765, 7
        %v1268 = vsel %vm399, %v1267, %v685
        %v1269 = vrot.slane %v845, 6
        %v1270 = vsel %vm401, %v1269, %v1268
        %v1271 = vrot.slane %v925, 5
        %v1272 = vsel %vm403, %v1271, %v1270
        %v1273 = vrot.slane %v1005, 4
        %v1274 = vsel %vm405, %v1273, %v1272
        %v1275 = vrot.slane %v1085, 3
        %v1276 = vsel %vm407, %v1275, %v1274
        %v1277 = vrot.slane %v1165, 2
        %v1278 = vsel %vm409, %v1277, %v1276
        %v1279 = vrot.slane %v1245, 1
        %v1280 = vsel %vm411, %v1279, %v1278
        %v1281 = vsel %vm322, %v1280, 0
        %1283 = vmatprep.subr.mxu0 0.0
        %1284 = vmatpush1.msra.mxu0 %v1248
        %1285 = vmatprep.subr.mxu0 0.0
        %1286 = vmatpush1.msra.mxu0 %v1249
        %1287 = vmatprep.subr.mxu0 0.0
        %1288 = vmatpush1.msra.mxu0 %v1250
        %1289 = vmatprep.subr.mxu0 0.0
        %1290 = vmatpush1.msra.mxu0 %v1251
        %1291 = vmatprep.subr.mxu0 0.0
        %1292 = vmatpush1.msra.mxu0 0.0
        %1293 = vmatprep.subr.mxu0 0.0
        %1294 = vmatpush1.msra.mxu0 0.0
        %1295 = vmatprep.subr.mxu0 0.0
        %1296 = vmatpush1.msra.mxu0 0.0
        %1297 = vmatprep.subr.mxu0 0.0
        %1298 = vmatpush1.msra.mxu0 0.0
        %1299 = vmatprep.subr.mxu0 0.0
        %1300 = vmatpush1.msra.mxu0 0.0
        %1301 = vmatprep.subr.mxu0 0.0
        %1302 = vmatpush1.msra.mxu0 0.0
        %1303 = vmatprep.subr.mxu0 0.0
        %1304 = vmatpush1.msra.mxu0 0.0
        %1305 = vmatprep.subr.mxu0 0.0
        %1306 = vmatpush1.msra.mxu0 0.0
        %1307 = vmatprep.subr.mxu0 0.0
        %1308 = vmatpush1.msra.mxu0 0.0
        %1309 = vmatprep.subr.mxu0 0.0
        %1310 = vmatpush1.msra.mxu0 0.0
        %1311 = vmatprep.subr.mxu0 0.0
        %1312 = vmatpush1.msra.mxu0 0.0
        %1313 = vmatprep.subr.mxu0 0.0
        %1314 = vmatpush1.msra.mxu0 0.0
        %1315 = vmatprep.subr.mxu0 0.0
        %1316 = vmatpush1.msra.mxu0 0.0
        %1317 = vmatprep.subr.mxu0 0.0
        %1318 = vmatpush1.msra.mxu0 0.0
        %1319 = vmatprep.subr.mxu0 0.0
        %1320 = vmatpush1.msra.mxu0 0.0
        %1321 = vmatprep.subr.mxu0 0.0
        %1322 = vmatpush1.msra.mxu0 0.0
        %1323 = vmatprep.subr.mxu0 0.0
        %1324 = vmatpush1.msra.mxu0 0.0
        %1325 = vmatprep.subr.mxu0 0.0
        %1326 = vmatpush1.msra.mxu0 0.0
        %1327 = vmatprep.subr.mxu0 0.0
        %1328 = vmatpush1.msra.mxu0 0.0
        %1329 = vmatprep.subr.mxu0 0.0
        %1330 = vmatpush1.msra.mxu0 0.0
        %1331 = vmatprep.subr.mxu0 0.0
        %1332 = vmatpush1.msra.mxu0 0.0
        %1333 = vmatprep.subr.mxu0 0.0
        %1334 = vmatpush1.msra.mxu0 0.0
        %1335 = vmatprep.subr.mxu0 0.0
        %1336 = vmatpush1.msra.mxu0 0.0
        %1337 = vmatprep.subr.mxu0 0.0
        %1338 = vmatpush1.msra.mxu0 0.0
        %1339 = vmatprep.subr.mxu0 0.0
        %1340 = vmatpush1.msra.mxu0 0.0
        %1341 = vmatprep.subr.mxu0 0.0
        %1342 = vmatpush1.msra.mxu0 0.0
        %1343 = vmatprep.subr.mxu0 0.0
        %1344 = vmatpush1.msra.mxu0 0.0
        %1345 = vmatprep.subr.mxu0 0.0
        %1346 = vmatpush1.msra.mxu0 0.0
        %1347 = vmatprep.mubr.f32.mxu0 0.0
        %1348 = vmatmul.mubr.f32.gmra.mrb[0].mxu0 %v1281
        %v1349 = vpop.f32.mrb[0].mxu0
        %v1350 = vadd.f32 %v1257, %v1349
        %v1351 = vpop.f32.mrb[0].mxu0
        %1352 = vdwg.mxu0
        %v1353 = vmax.f32 %v1350, 0.0
        %v1354 = vld [vmem:[%s5] sm:$0xff]
        %v1355 = vld [vmem:[%s5 + $0x8] sm:$0xff]
        %v1356 = vld [vmem:[%s6] sm:$0x1]
        %v1358 = vlaneseq
        %v1359 = vshrl.u32 %v1358, 7
        %v1360 = vsub.s32 0, %v1359
        %v1361 = vrot.slane %v1356, %v1360
        %vm1363 = vcmask 130048
        %v1365 = vsel %vm1363, %v1353, 0
        %1367 = vmatprep.subr.mxu0 0.0
        %1368 = vmatpush1.msra.mxu0 %v1354
        %1369 = vmatprep.subr.mxu0 0.0
        %1370 = vmatpush1.msra.mxu0 %v1355
        %1371 = vmatprep.subr.mxu0 0.0
        %1372 = vmatpush1.msra.mxu0 0.0
        %1373 = vmatprep.subr.mxu0 0.0
        %1374 = vmatpush1.msra.mxu0 0.0
        %1375 = vmatprep.subr.mxu0 0.0
        %1376 = vmatpush1.msra.mxu0 0.0
        %1377 = vmatprep.subr.mxu0 0.0
        %1378 = vmatpush1.msra.mxu0 0.0
        %1379 = vmatprep.subr.mxu0 0.0
        %1380 = vmatpush1.msra.mxu0 0.0
        %1381 = vmatprep.subr.mxu0 0.0
        %1382 = vmatpush1.msra.mxu0 0.0
        %1383 = vmatprep.subr.mxu0 0.0
        %1384 = vmatpush1.msra.mxu0 0.0
        %1385 = vmatprep.subr.mxu0 0.0
        %1386 = vmatpush1.msra.mxu0 0.0
        %1387 = vmatprep.subr.mxu0 0.0
        %1388 = vmatpush1.msra.mxu0 0.0
        %1389 = vmatprep.subr.mxu0 0.0
        %1390 = vmatpush1.msra.mxu0 0.0
        %1391 = vmatprep.subr.mxu0 0.0
        %1392 = vmatpush1.msra.mxu0 0.0
        %1393 = vmatprep.subr.mxu0 0.0
        %1394 = vmatpush1.msra.mxu0 0.0
        %1395 = vmatprep.subr.mxu0 0.0
        %1396 = vmatpush1.msra.mxu0 0.0
        %1397 = vmatprep.subr.mxu0 0.0
        %1398 = vmatpush1.msra.mxu0 0.0
        %1399 = vmatprep.subr.mxu0 0.0
        %1400 = vmatpush1.msra.mxu0 0.0
        %1401 = vmatprep.subr.mxu0 0.0
        %1402 = vmatpush1.msra.mxu0 0.0
        %1403 = vmatprep.subr.mxu0 0.0
        %1404 = vmatpush1.msra.mxu0 0.0
        %1405 = vmatprep.subr.mxu0 0.0
        %1406 = vmatpush1.msra.mxu0 0.0
        %1407 = vmatprep.subr.mxu0 0.0
        %1408 = vmatpush1.msra.mxu0 0.0
        %1409 = vmatprep.subr.mxu0 0.0
        %1410 = vmatpush1.msra.mxu0 0.0
        %1411 = vmatprep.subr.mxu0 0.0
        %1412 = vmatpush1.msra.mxu0 0.0
        %1413 = vmatprep.subr.mxu0 0.0
        %1414 = vmatpush1.msra.mxu0 0.0
        %1415 = vmatprep.subr.mxu0 0.0
        %1416 = vmatpush1.msra.mxu0 0.0
        %1417 = vmatprep.subr.mxu0 0.0
        %1418 = vmatpush1.msra.mxu0 0.0
        %1419 = vmatprep.subr.mxu0 0.0
        %1420 = vmatpush1.msra.mxu0 0.0
        %1421 = vmatprep.subr.mxu0 0.0
        %1422 = vmatpush1.msra.mxu0 0.0
        %1423 = vmatprep.subr.mxu0 0.0
        %1424 = vmatpush1.msra.mxu0 0.0
        %1425 = vmatprep.subr.mxu0 0.0
        %1426 = vmatpush1.msra.mxu0 0.0
        %1427 = vmatprep.subr.mxu0 0.0
        %1428 = vmatpush1.msra.mxu0 0.0
        %1429 = vmatprep.subr.mxu0 0.0
        %1430 = vmatpush1.msra.mxu0 0.0
        %1431 = vmatprep.mubr.f32.mxu0 0.0
        %1432 = vmatmul.mubr.f32.gmra.mrb[0].mxu0 %v1365
        %v1433 = vpop.f32.mrb[0].mxu0
        %v1434 = vadd.f32 %v1361, %v1433
        %v1435 = vpop.f32.mrb[0].mxu0
        %1436 = vdwg.mxu0
        %1437 = vmax.xlane.f32.xlu0 %v1434
        %v1438 = vpop.xlane.xlu0 %1437
        %v1439 = vsub.f32 %v1434, %v1438
        %v1440 = vmul.f32 %v1439, 1.442695
        %v1441 = vpow.pop %v1440
        %1442 = vadd.xlane.f32.xlu0 %v1441
        %v1443 = vpop.xlane.xlu0 %1442
        %v1444 = vrcp.pop %v1443
        %v1445 = vmul.f32 %v1441, %v1444
        %1446 = vst [vmem:[%s297] sm:$0xff] %v1445
        %s1447 = sand.u32 %s185, 1
        %s1448 = scalar_lea.sflag [#allocation5], %s1447
        %s1449 = sand.u32 %s185, 1
        %s1450 = smul.addr %s1449, 8
        %s1451 = scalar_lea.vmem [#allocation6], %s1450
        // Predicated region
        $region53: #{tpu_custom_call.1} parent=47 // pred_check
          %p1452 = pneg %p195
        $region54: #{tpu_custom_call.1} parent=47 // pred_check_branch
          %1454 = sbr.rel (%p1452) target = $region56
        $region55: #{tpu_custom_call.1} parent=47 // pred_region
          %s1456 = ssub.s32 128, 128
          %1457 = vsyncadd %s1448, %s1456
          %s1458 = smul.addr %s25, 128
          %s1459 = scalar_lea.hbm %s7, %s1458
          %s1461 = sshll.u32 %s1451, 4
          %s1462 = int_to_ptr.vmem [resolvable:$true] %s1461
          %1464 = dma.vmem_to_hbm [thread:$0]  %s1462, 128, %s1459, %s1448
        $region56: #{tpu_custom_call.1} parent=47 // pred_fallthru
          _
      $region48: #{tpu_custom_call.1} parent=5 // pred_fallthru
        _
      %p1465 = scmp.le.s32.totalorder 2, %s20
      // Predicated region
      $region57: #{tpu_custom_call.1} parent=5 // pred_check
        %p1466 = pneg %p1465
      $region58: #{tpu_custom_call.1} parent=5 // pred_check_branch
        %1468 = sbr.rel (%p1466) target = $region60
      $region59: #{tpu_custom_call.1} parent=5 // pred_region
        %s1469 = ssub.s32 %s20, 2
        // Predicated region
        $region61: #{tpu_custom_call.1} parent=59 // pred_check
          %p1470 = pneg %p201
        $region62: #{tpu_custom_call.1} parent=59 // pred_check_branch
          %1472 = sbr.rel (%p1470) target = $region64
        $region63: #{tpu_custom_call.1} parent=59 // pred_region
          %s1473 = sand.u32 %s186, 1
          %s1474 = scalar_lea.sflag [#allocation5], %s1473
          %s1475 = sand.u32 %s186, 1
          %s1476 = smul.addr %s1475, 8
          %s1477 = scalar_lea.vmem [#allocation6], %s1476
          %1478 = dma.done %s1474, 128
        $region64: #{tpu_custom_call.1} parent=59 // pred_fallthru
          _
      $region60: #{tpu_custom_call.1} parent=5 // pred_fallthru
        _
    $region6: #{tpu_custom_call.1} parent=1 // loop_footer
      %s24 = sadd.s32 1, %s20
    $region7: #{tpu_custom_call.1} parent=1 // loop_footer_branch
      %19 = sbr.rel target = $region3
    $region8: #{tpu_custom_call.1} parent=1 // loop_exit
      _
    %1479 = vsyncpa [#allocation4], 1
    %s1480 = scalar_lea.sflag [#allocation4], 1
    %1481 = vsyncpa %s1480, 1
    %1482 = vsyncpa [#allocation5], 1
    %s1483 = scalar_lea.sflag [#allocation5], 1
    %1484 = vsyncpa %s1483, 1

</llo_original>
